<compile_context>
chip_gen: v7x
topology: tpu7x:2x2x1
jax: 0.10.0
libtpu: 0.0.40
codegen_flags: <defaults>
</compile_context>

<pallas_src>
import functools

import jax
import jax.numpy as jnp
from jax.experimental import pallas as pl
from jax.experimental.pallas import tpu as pltpu

_LANE = 128


def _act(x, kind):
    if kind == "relu":
        return jnp.maximum(x, 0.0)
    if kind == "relu6":
        return jnp.clip(x, 0.0, 6.0)
    if kind == "hard-swish":
        return (1.0 / 6.0) * x * jnp.clip(x + 3.0, 0.0, 6.0)
    if kind == "hard-sigmoid":
        return 0.16667 * jnp.clip(x + 3.0, 0.0, 6.0)   # matches the torch module constant
    if kind == "gelu":
        return jax.nn.gelu(x, approximate=False)       # torch nn.GELU default = erf
    if kind == "none":
        return x
    raise ValueError("Unknown activation %s" % kind)


def _round_up(v, m):
    return ((v + m - 1) // m) * m


def _pick_tile_h(ho, target):
    """Largest divisor of ho that is <= target (so the strip grid is exact)."""
    t = min(ho, max(1, target))
    while ho % t:
        t -= 1
    return t


def separable_conv_kernel(
    x_ref,      # (1, Hp, Wp, Cin_p)   padded input, one batch element (resident across strips)
    wdw_ref,    # (k, k, Cin_p)        depthwise weights (f32)
    s1_ref,     # (1, Cin_p)           folded BN1 scale
    b1_ref,     # (1, Cin_p)           folded BN1 shift
    wpw_ref,    # (Cin_p, Cout_p)      pointwise weights (bf16)
    s2_ref,     # (1, Cout_p)          folded BN2 scale
    b2_ref,     # (1, Cout_p)          folded BN2 shift
    out_ref,    # (1, tile_h, Wo, Cout_p)
    acc_ref,    # VMEM scratch (tile_h, Wo, Cin_p) f32
    *, k, stride, tile_h, Wo, activation,
):
    strip = pl.program_id(1)
    row0 = pl.multiple_of(strip * (tile_h * stride), tile_h * stride)

    # ---- depthwise k x k conv: slice each tap off the Ref, accumulate in VMEM scratch ----
    first = True
    for kh in range(k):
        for kw in range(k):
            if stride == 1:
                win = x_ref[0, pl.ds(row0 + kh, tile_h), kw:kw + Wo, :]
            else:
                blk = x_ref[0, pl.ds(row0 + kh, stride * (tile_h - 1) + 1),
                            kw:kw + stride * (Wo - 1) + 1, :]
                win = blk[::stride, ::stride, :]
            tap = win.astype(jnp.float32) * wdw_ref[kh, kw, :]
            if first:
                acc_ref[...] = tap
                first = False
            else:
                acc_ref[...] += tap

    # ---- BN1 (folded) + activation (f32 on the VPU) ----
    h = _act(acc_ref[...] * s1_ref[0] + b1_ref[0], activation)       # (tile_h, Wo, Cin_p)

    # ---- pointwise 1x1 conv as a bf16 MXU matmul with f32 accumulation ----
    cin_p = h.shape[-1]
    h2 = h.reshape(tile_h * Wo, cin_p).astype(jnp.bfloat16)
    y = jnp.dot(h2, wpw_ref[...], preferred_element_type=jnp.float32)
    y = y.reshape(tile_h, Wo, -1)

    # ---- BN2 (folded) + activation ----
    y = _act(y * s2_ref[0] + b2_ref[0], activation)
    out_ref[0] = y.astype(out_ref.dtype)


def separable_conv(x_nchw, params, *, kernel_size=3, stride=1, activation="relu",
                   tile_h_target=8):
    """SeparableConv forward. Input/output in NCHW (PyTorch convention)."""
    n, cin, hh, ww = x_nchw.shape
    k = kernel_size
    cout = params["w_pw"].shape[1]
    pad = k // 2   # nn.Conv2d(padding=k//2) pads symmetrically -> same formula here

    cin_p = _round_up(cin, _LANE)
    cout_p = _round_up(cout, _LANE)

    hp, wp = hh + 2 * pad, ww + 2 * pad
    ho = (hh + 2 * pad - k) // stride + 1
    wo = (ww + 2 * pad - k) // stride + 1
    tile_h = _pick_tile_h(ho, tile_h_target)
    n_strips = ho // tile_h

    # TODO(synk): keep the surrounding model NHWC end-to-end and fold the zero pad
    # into the kernel (masked border taps) to drop these extra wrapper HBM passes.
    x = jnp.transpose(x_nchw, (0, 2, 3, 1))                                   # NHWC
    x = jnp.pad(x, ((0, 0), (pad, pad), (pad, pad), (0, cin_p - cin)))

    # One-time parameter prep (in a real deployment this is done once at load time):
    # lane-pad channels, cast the pointwise weight to bf16 for the MXU.
    w_dw = jnp.pad(params["w_dw"], ((0, 0), (0, 0), (0, cin_p - cin)))
    w_pw = jnp.pad(params["w_pw"], ((0, cin_p - cin), (0, cout_p - cout))).astype(jnp.bfloat16)
    s1 = jnp.pad(params["scale1"], (0, cin_p - cin))[None, :]
    b1 = jnp.pad(params["shift1"], (0, cin_p - cin))[None, :]
    s2 = jnp.pad(params["scale2"], (0, cout_p - cout))[None, :]
    b2 = jnp.pad(params["shift2"], (0, cout_p - cout))[None, :]

    kernel = functools.partial(
        separable_conv_kernel,
        k=k, stride=stride, tile_h=tile_h, Wo=wo, activation=activation)

    # VMEM budget (explicit, conservative; capped below v7x's 64 MiB physical VMEM).
    bpe = 4
    vmem_est = (2 * hp * wp * cin_p * bpe              # input (double-buffered)
                + 2 * tile_h * wo * cout_p * bpe       # output strips (double-buffered)
                + tile_h * wo * cin_p * bpe            # f32 accumulator scratch
                + 2 * (k * k * cin_p * bpe + 2 * cin_p * bpe
                       + cin_p * cout_p * 2 + 2 * cout_p * bpe))
    vmem_limit = int(min(64 * 2**20, max(32 * 2**20, 2 * vmem_est)))

    cost = pl.CostEstimate(
        flops=2 * n * ho * wo * (k * k * cin_p + cin_p * cout_p),
        transcendentals=(n * ho * wo * (cin_p + cout_p)) if activation == "gelu" else 0,
        bytes_accessed=int(x.size) * bpe + n * ho * wo * cout_p * bpe
                       + int(w_dw.size) * bpe + int(w_pw.size) * 2)

    # TODO(synk): for large spatial extents, block the input over H with a halo
    # (pl.Element-indexed strips) instead of keeping the full padded image resident.
    out = pl.pallas_call(
        kernel,
        out_shape=jax.ShapeDtypeStruct((n, ho, wo, cout_p), jnp.float32),
        grid_spec=pltpu.PrefetchScalarGridSpec(
            num_scalar_prefetch=0,
            grid=(n, n_strips),
            in_specs=[
                pl.BlockSpec((1, hp, wp, cin_p), lambda b, s: (b, 0, 0, 0)),
                pl.BlockSpec((k, k, cin_p), lambda b, s: (0, 0, 0)),
                pl.BlockSpec((1, cin_p), lambda b, s: (0, 0)),
                pl.BlockSpec((1, cin_p), lambda b, s: (0, 0)),
                pl.BlockSpec((cin_p, cout_p), lambda b, s: (0, 0)),
                pl.BlockSpec((1, cout_p), lambda b, s: (0, 0)),
                pl.BlockSpec((1, cout_p), lambda b, s: (0, 0)),
            ],
            out_specs=pl.BlockSpec((1, tile_h, wo, cout_p), lambda b, s: (b, s, 0, 0)),
            scratch_shapes=[pltpu.VMEM((tile_h, wo, cin_p), jnp.float32)],
        ),
        compiler_params=pltpu.CompilerParams(
            dimension_semantics=("parallel", "parallel"),
            vmem_limit_bytes=vmem_limit),
        cost_estimate=cost,
    )(x, w_dw, s1, b1, w_pw, s2, b2)

    out = out[..., :cout]                        # drop lane padding
    return jnp.transpose(out, (0, 3, 1, 2))      # back to NCHW


def make_params(key, in_channels, out_channels, kernel_size, eps=1e-5):
    """Deterministic synthetic parameters (shapes follow the torch module)."""
    ks = jax.random.split(key, 8)
    # depthwise Conv2d(in, in, k, groups=in, bias=False): torch weight (Cin,1,k,k)
    w_dw_t = 0.1 * jax.random.normal(ks[0], (in_channels, 1, kernel_size, kernel_size), jnp.float32)
    # pointwise Conv2d(in, out, 1, bias=False): torch weight (Cout,Cin,1,1)
    w_pw_t = 0.1 * jax.random.normal(ks[1], (out_channels, in_channels, 1, 1), jnp.float32)

    # BatchNorm2d params (inference)
    g1 = 1.0 + 0.1 * jax.random.normal(ks[2], (in_channels,), jnp.float32)
    b1 = 0.1 * jax.random.normal(ks[3], (in_channels,), jnp.float32)
    m1 = 0.1 * jax.random.normal(ks[4], (in_channels,), jnp.float32)
    v1 = jnp.abs(1.0 + 0.1 * jax.random.normal(ks[5], (in_channels,), jnp.float32))
    g2 = 1.0 + 0.1 * jax.random.normal(ks[6], (out_channels,), jnp.float32)
    b2 = 0.1 * jax.random.normal(ks[7], (out_channels,), jnp.float32)
    m2 = jnp.zeros((out_channels,), jnp.float32)
    v2 = jnp.ones((out_channels,), jnp.float32)

    scale1 = g1 / jnp.sqrt(v1 + eps)
    shift1 = b1 - m1 * scale1
    scale2 = g2 / jnp.sqrt(v2 + eps)
    shift2 = b2 - m2 * scale2

    return {
        # kernel-layout weights (unpadded; wrapper lane-pads / casts once)
        "w_dw": jnp.transpose(w_dw_t[:, 0, :, :], (1, 2, 0)),        # (k, k, Cin)
        "w_pw": jnp.transpose(w_pw_t[:, :, 0, 0], (1, 0)),           # (Cin, Cout)
        "scale1": scale1, "shift1": shift1,                          # (Cin,)
        "scale2": scale2, "shift2": shift2,                          # (Cout,)
        # torch-layout weights kept for the XLA reference check
        "_w_dw_t": w_dw_t, "_w_pw_t": w_pw_t,
    }


def _reference(x_nchw, params, kernel_size, stride):
    """Pure-JAX (XLA, f32) reference of the same forward pass (relu path), NCHW."""
    cin = x_nchw.shape[1]
    pad = kernel_size // 2
    h = jax.lax.conv_general_dilated(
        x_nchw, params["_w_dw_t"], (stride, stride),
        [(pad, pad), (pad, pad)], feature_group_count=cin,
        dimension_numbers=("NCHW", "OIHW", "NCHW"))
    h = h * params["scale1"][None, :, None, None] + params["shift1"][None, :, None, None]
    h = jnp.maximum(h, 0.0)
    y = jax.lax.conv_general_dilated(
        h, params["_w_pw_t"], (1, 1), [(0, 0), (0, 0)],
        dimension_numbers=("NCHW", "OIHW", "NCHW"))
    y = y * params["scale2"][None, :, None, None] + params["shift2"][None, :, None, None]
    return jnp.maximum(y, 0.0)


if __name__ == "__main__":
    key = jax.random.PRNGKey(0)
    kx, kp = jax.random.split(key)

    N, CIN, COUT, H, W, K, S = 2, 4, 8, 16, 16, 3, 1
    x = jax.random.normal(kx, (N, CIN, H, W), jnp.float32)
    params = make_params(kp, CIN, COUT, K)

    out = separable_conv(x, params, kernel_size=K, stride=S, activation="relu")
    out = jax.block_until_ready(out)

    ref = jax.block_until_ready(_reference(x, params, K, S))
    assert out.shape == (N, COUT, H, W)
    # Tolerance sized for the bf16 pointwise MXU matmul (depthwise / BN / act stay f32).
    max_err = float(jnp.max(jnp.abs(out - ref)))
    assert jnp.allclose(out, ref, rtol=2e-2, atol=2e-2), max_err

    print("KERNEL_OK")
</pallas_src>

<mosaic_0001>
module attributes {stable_mosaic.version = 11 : i64} {
  func.func @separable_conv_kernel(%arg0: i32, %arg1: i32, %arg2: memref<1x18x18x128xf32, #tpu.memory_space<vmem>>, %arg3: memref<3x3x128xf32, #tpu.memory_space<vmem>>, %arg4: memref<1x128xf32, #tpu.memory_space<vmem>>, %arg5: memref<1x128xf32, #tpu.memory_space<vmem>>, %arg6: memref<128x128xbf16, #tpu.memory_space<vmem>>, %arg7: memref<1x128xf32, #tpu.memory_space<vmem>>, %arg8: memref<1x128xf32, #tpu.memory_space<vmem>>, %arg9: memref<1x8x16x128xf32, #tpu.memory_space<vmem>>, %arg10: memref<8x16x128xf32, #tpu.memory_space<vmem>>) attributes {dimension_semantics = [#tpu.dimension_semantics<parallel>, #tpu.dimension_semantics<parallel>], iteration_bounds = array<i64: 2, 2>, scalar_prefetch = 0 : i64, scratch_operands = 1 : i64, tpu.core_type = #tpu.core_type<tc>, window_params = [{transform_indices = @transform_0, window_bounds = array<i64: 1, 18, 18, 128>}, {pipeline_mode = #tpu.pipeline_mode<synchronous>, transform_indices = @transform_1, window_bounds = array<i64: 3, 3, 128>}, {pipeline_mode = #tpu.pipeline_mode<synchronous>, transform_indices = @transform_2, window_bounds = array<i64: 1, 128>}, {pipeline_mode = #tpu.pipeline_mode<synchronous>, transform_indices = @transform_3, window_bounds = array<i64: 1, 128>}, {pipeline_mode = #tpu.pipeline_mode<synchronous>, transform_indices = @transform_4, window_bounds = array<i64: 128, 128>}, {pipeline_mode = #tpu.pipeline_mode<synchronous>, transform_indices = @transform_5, window_bounds = array<i64: 1, 128>}, {pipeline_mode = #tpu.pipeline_mode<synchronous>, transform_indices = @transform_6, window_bounds = array<i64: 1, 128>}, {transform_indices = @transform_7, window_bounds = array<i64: 1, 8, 16, 128>}]} {
    %c8_i32 = arith.constant 8 : i32
    %0 = arith.muli %arg1, %c8_i32 : i32
    %1 = tpu.assume_multiple %0, 8 : i32
    %c0_i32 = arith.constant 0 : i32
    %2 = arith.addi %1, %c0_i32 : i32
    %c0 = arith.constant 0 : index
    %3 = arith.index_cast %2 : i32 to index
    %c0_0 = arith.constant 0 : index
    %c0_1 = arith.constant 0 : index
    %4 = vector.load %arg2[%c0, %3, %c0_0, %c0_1] : memref<1x18x18x128xf32, #tpu.memory_space<vmem>>, vector<1x8x16x128xf32>
    %5 = vector.shape_cast %4 : vector<1x8x16x128xf32> to vector<8x16x128xf32>
    %c0_2 = arith.constant 0 : index
    %c0_3 = arith.constant 0 : index
    %c0_4 = arith.constant 0 : index
    %6 = vector.load %arg3[%c0_2, %c0_3, %c0_4] : memref<3x3x128xf32, #tpu.memory_space<vmem>>, vector<1x1x128xf32>
    %7 = vector.shape_cast %6 : vector<1x1x128xf32> to vector<128xf32>
    %8 = vector.shape_cast %7 : vector<128xf32> to vector<1x1x128xf32>
    %9 = vector.broadcast %8 : vector<1x1x128xf32> to vector<8x16x128xf32>
    %10 = arith.mulf %5, %9 : vector<8x16x128xf32>
    %c0_5 = arith.constant 0 : index
    %c0_6 = arith.constant 0 : index
    %c0_7 = arith.constant 0 : index
    %11 = vector.load %arg10[%c0_5, %c0_6, %c0_7] : memref<8x16x128xf32, #tpu.memory_space<vmem>>, vector<8x16x128xf32>
    tpu.vector_store %arg10[%c0_5, %c0_6, %c0_7], %10 {strides = array<i32>} : memref<8x16x128xf32, #tpu.memory_space<vmem>>, vector<8x16x128xf32>,
    %c0_i32_8 = arith.constant 0 : i32
    %12 = arith.addi %1, %c0_i32_8 : i32
    %c0_9 = arith.constant 0 : index
    %13 = arith.index_cast %12 : i32 to index
    %c1 = arith.constant 1 : index
    %c0_10 = arith.constant 0 : index
    %14 = vector.load %arg2[%c0_9, %13, %c1, %c0_10] : memref<1x18x18x128xf32, #tpu.memory_space<vmem>>, vector<1x8x16x128xf32>
    %15 = vector.shape_cast %14 : vector<1x8x16x128xf32> to vector<8x16x128xf32>
    %c0_11 = arith.constant 0 : index
    %c1_12 = arith.constant 1 : index
    %c0_13 = arith.constant 0 : index
    %16 = vector.load %arg3[%c0_11, %c1_12, %c0_13] : memref<3x3x128xf32, #tpu.memory_space<vmem>>, vector<1x1x128xf32>
    %17 = vector.shape_cast %16 : vector<1x1x128xf32> to vector<128xf32>
    %18 = vector.shape_cast %17 : vector<128xf32> to vector<1x1x128xf32>
    %19 = vector.broadcast %18 : vector<1x1x128xf32> to vector<8x16x128xf32>
    %20 = arith.mulf %15, %19 : vector<8x16x128xf32>
    %c0_14 = arith.constant 0 : index
    %c0_15 = arith.constant 0 : index
    %c0_16 = arith.constant 0 : index
    %21 = vector.load %arg10[%c0_14, %c0_15, %c0_16] : memref<8x16x128xf32, #tpu.memory_space<vmem>>, vector<8x16x128xf32>
    %22 = arith.addf %21, %20 : vector<8x16x128xf32>
    %c0_17 = arith.constant 0 : index
    %c0_18 = arith.constant 0 : index
    %c0_19 = arith.constant 0 : index
    %23 = vector.load %arg10[%c0_17, %c0_18, %c0_19] : memref<8x16x128xf32, #tpu.memory_space<vmem>>, vector<8x16x128xf32>
    tpu.vector_store %arg10[%c0_17, %c0_18, %c0_19], %22 {strides = array<i32>} : memref<8x16x128xf32, #tpu.memory_space<vmem>>, vector<8x16x128xf32>,
    %c0_i32_20 = arith.constant 0 : i32
    %24 = arith.addi %1, %c0_i32_20 : i32
    %c0_21 = arith.constant 0 : index
    %25 = arith.index_cast %24 : i32 to index
    %c2 = arith.constant 2 : index
    %c0_22 = arith.constant 0 : index
    %26 = vector.load %arg2[%c0_21, %25, %c2, %c0_22] : memref<1x18x18x128xf32, #tpu.memory_space<vmem>>, vector<1x8x16x128xf32>
    %27 = vector.shape_cast %26 : vector<1x8x16x128xf32> to vector<8x16x128xf32>
    %c0_23 = arith.constant 0 : index
    %c2_24 = arith.constant 2 : index
    %c0_25 = arith.constant 0 : index
    %28 = vector.load %arg3[%c0_23, %c2_24, %c0_25] : memref<3x3x128xf32, #tpu.memory_space<vmem>>, vector<1x1x128xf32>
    %29 = vector.shape_cast %28 : vector<1x1x128xf32> to vector<128xf32>
    %30 = vector.shape_cast %29 : vector<128xf32> to vector<1x1x128xf32>
    %31 = vector.broadcast %30 : vector<1x1x128xf32> to vector<8x16x128xf32>
    %32 = arith.mulf %27, %31 : vector<8x16x128xf32>
    %c0_26 = arith.constant 0 : index
    %c0_27 = arith.constant 0 : index
    %c0_28 = arith.constant 0 : index
    %33 = vector.load %arg10[%c0_26, %c0_27, %c0_28] : memref<8x16x128xf32, #tpu.memory_space<vmem>>, vector<8x16x128xf32>
    %34 = arith.addf %33, %32 : vector<8x16x128xf32>
    %c0_29 = arith.constant 0 : index
    %c0_30 = arith.constant 0 : index
    %c0_31 = arith.constant 0 : index
    %35 = vector.load %arg10[%c0_29, %c0_30, %c0_31] : memref<8x16x128xf32, #tpu.memory_space<vmem>>, vector<8x16x128xf32>
    tpu.vector_store %arg10[%c0_29, %c0_30, %c0_31], %34 {strides = array<i32>} : memref<8x16x128xf32, #tpu.memory_space<vmem>>, vector<8x16x128xf32>,
    %c1_i32 = arith.constant 1 : i32
    %36 = arith.addi %1, %c1_i32 : i32
    %c0_32 = arith.constant 0 : index
    %37 = arith.index_cast %36 : i32 to index
    %c0_33 = arith.constant 0 : index
    %c0_34 = arith.constant 0 : index
    %38 = vector.load %arg2[%c0_32, %37, %c0_33, %c0_34] : memref<1x18x18x128xf32, #tpu.memory_space<vmem>>, vector<1x8x16x128xf32>
    %39 = vector.shape_cast %38 : vector<1x8x16x128xf32> to vector<8x16x128xf32>
    %c1_35 = arith.constant 1 : index
    %c0_36 = arith.constant 0 : index
    %c0_37 = arith.constant 0 : index
    %40 = vector.load %arg3[%c1_35, %c0_36, %c0_37] : memref<3x3x128xf32, #tpu.memory_space<vmem>>, vector<1x1x128xf32>
    %41 = vector.shape_cast %40 : vector<1x1x128xf32> to vector<128xf32>
    %42 = vector.shape_cast %41 : vector<128xf32> to vector<1x1x128xf32>
    %43 = vector.broadcast %42 : vector<1x1x128xf32> to vector<8x16x128xf32>
    %44 = arith.mulf %39, %43 : vector<8x16x128xf32>
    %c0_38 = arith.constant 0 : index
    %c0_39 = arith.constant 0 : index
    %c0_40 = arith.constant 0 : index
    %45 = vector.load %arg10[%c0_38, %c0_39, %c0_40] : memref<8x16x128xf32, #tpu.memory_space<vmem>>, vector<8x16x128xf32>
    %46 = arith.addf %45, %44 : vector<8x16x128xf32>
    %c0_41 = arith.constant 0 : index
    %c0_42 = arith.constant 0 : index
    %c0_43 = arith.constant 0 : index
    %47 = vector.load %arg10[%c0_41, %c0_42, %c0_43] : memref<8x16x128xf32, #tpu.memory_space<vmem>>, vector<8x16x128xf32>
    tpu.vector_store %arg10[%c0_41, %c0_42, %c0_43], %46 {strides = array<i32>} : memref<8x16x128xf32, #tpu.memory_space<vmem>>, vector<8x16x128xf32>,
    %c1_i32_44 = arith.constant 1 : i32
    %48 = arith.addi %1, %c1_i32_44 : i32
    %c0_45 = arith.constant 0 : index
    %49 = arith.index_cast %48 : i32 to index
    %c1_46 = arith.constant 1 : index
    %c0_47 = arith.constant 0 : index
    %50 = vector.load %arg2[%c0_45, %49, %c1_46, %c0_47] : memref<1x18x18x128xf32, #tpu.memory_space<vmem>>, vector<1x8x16x128xf32>
    %51 = vector.shape_cast %50 : vector<1x8x16x128xf32> to vector<8x16x128xf32>
    %c1_48 = arith.constant 1 : index
    %c1_49 = arith.constant 1 : index
    %c0_50 = arith.constant 0 : index
    %52 = vector.load %arg3[%c1_48, %c1_49, %c0_50] : memref<3x3x128xf32, #tpu.memory_space<vmem>>, vector<1x1x128xf32>
    %53 = vector.shape_cast %52 : vector<1x1x128xf32> to vector<128xf32>
    %54 = vector.shape_cast %53 : vector<128xf32> to vector<1x1x128xf32>
    %55 = vector.broadcast %54 : vector<1x1x128xf32> to vector<8x16x128xf32>
    %56 = arith.mulf %51, %55 : vector<8x16x128xf32>
    %c0_51 = arith.constant 0 : index
    %c0_52 = arith.constant 0 : index
    %c0_53 = arith.constant 0 : index
    %57 = vector.load %arg10[%c0_51, %c0_52, %c0_53] : memref<8x16x128xf32, #tpu.memory_space<vmem>>, vector<8x16x128xf32>
    %58 = arith.addf %57, %56 : vector<8x16x128xf32>
    %c0_54 = arith.constant 0 : index
    %c0_55 = arith.constant 0 : index
    %c0_56 = arith.constant 0 : index
    %59 = vector.load %arg10[%c0_54, %c0_55, %c0_56] : memref<8x16x128xf32, #tpu.memory_space<vmem>>, vector<8x16x128xf32>
    tpu.vector_store %arg10[%c0_54, %c0_55, %c0_56], %58 {strides = array<i32>} : memref<8x16x128xf32, #tpu.memory_space<vmem>>, vector<8x16x128xf32>,
    %c1_i32_57 = arith.constant 1 : i32
    %60 = arith.addi %1, %c1_i32_57 : i32
    %c0_58 = arith.constant 0 : index
    %61 = arith.index_cast %60 : i32 to index
    %c2_59 = arith.constant 2 : index
    %c0_60 = arith.constant 0 : index
    %62 = vector.load %arg2[%c0_58, %61, %c2_59, %c0_60] : memref<1x18x18x128xf32, #tpu.memory_space<vmem>>, vector<1x8x16x128xf32>
    %63 = vector.shape_cast %62 : vector<1x8x16x128xf32> to vector<8x16x128xf32>
    %c1_61 = arith.constant 1 : index
    %c2_62 = arith.constant 2 : index
    %c0_63 = arith.constant 0 : index
    %64 = vector.load %arg3[%c1_61, %c2_62, %c0_63] : memref<3x3x128xf32, #tpu.memory_space<vmem>>, vector<1x1x128xf32>
    %65 = vector.shape_cast %64 : vector<1x1x128xf32> to vector<128xf32>
    %66 = vector.shape_cast %65 : vector<128xf32> to vector<1x1x128xf32>
    %67 = vector.broadcast %66 : vector<1x1x128xf32> to vector<8x16x128xf32>
    %68 = arith.mulf %63, %67 : vector<8x16x128xf32>
    %c0_64 = arith.constant 0 : index
    %c0_65 = arith.constant 0 : index
    %c0_66 = arith.constant 0 : index
    %69 = vector.load %arg10[%c0_64, %c0_65, %c0_66] : memref<8x16x128xf32, #tpu.memory_space<vmem>>, vector<8x16x128xf32>
    %70 = arith.addf %69, %68 : vector<8x16x128xf32>
    %c0_67 = arith.constant 0 : index
    %c0_68 = arith.constant 0 : index
    %c0_69 = arith.constant 0 : index
    %71 = vector.load %arg10[%c0_67, %c0_68, %c0_69] : memref<8x16x128xf32, #tpu.memory_space<vmem>>, vector<8x16x128xf32>
    tpu.vector_store %arg10[%c0_67, %c0_68, %c0_69], %70 {strides = array<i32>} : memref<8x16x128xf32, #tpu.memory_space<vmem>>, vector<8x16x128xf32>,
    %c2_i32 = arith.constant 2 : i32
    %72 = arith.addi %1, %c2_i32 : i32
    %c0_70 = arith.constant 0 : index
    %73 = arith.index_cast %72 : i32 to index
    %c0_71 = arith.constant 0 : index
    %c0_72 = arith.constant 0 : index
    %74 = vector.load %arg2[%c0_70, %73, %c0_71, %c0_72] : memref<1x18x18x128xf32, #tpu.memory_space<vmem>>, vector<1x8x16x128xf32>
    %75 = vector.shape_cast %74 : vector<1x8x16x128xf32> to vector<8x16x128xf32>
    %c2_73 = arith.constant 2 : index
    %c0_74 = arith.constant 0 : index
    %c0_75 = arith.constant 0 : index
    %76 = vector.load %arg3[%c2_73, %c0_74, %c0_75] : memref<3x3x128xf32, #tpu.memory_space<vmem>>, vector<1x1x128xf32>
    %77 = vector.shape_cast %76 : vector<1x1x128xf32> to vector<128xf32>
    %78 = vector.shape_cast %77 : vector<128xf32> to vector<1x1x128xf32>
    %79 = vector.broadcast %78 : vector<1x1x128xf32> to vector<8x16x128xf32>
    %80 = arith.mulf %75, %79 : vector<8x16x128xf32>
    %c0_76 = arith.constant 0 : index
    %c0_77 = arith.constant 0 : index
    %c0_78 = arith.constant 0 : index
    %81 = vector.load %arg10[%c0_76, %c0_77, %c0_78] : memref<8x16x128xf32, #tpu.memory_space<vmem>>, vector<8x16x128xf32>
    %82 = arith.addf %81, %80 : vector<8x16x128xf32>
    %c0_79 = arith.constant 0 : index
    %c0_80 = arith.constant 0 : index
    %c0_81 = arith.constant 0 : index
    %83 = vector.load %arg10[%c0_79, %c0_80, %c0_81] : memref<8x16x128xf32, #tpu.memory_space<vmem>>, vector<8x16x128xf32>
    tpu.vector_store %arg10[%c0_79, %c0_80, %c0_81], %82 {strides = array<i32>} : memref<8x16x128xf32, #tpu.memory_space<vmem>>, vector<8x16x128xf32>,
    %c2_i32_82 = arith.constant 2 : i32
    %84 = arith.addi %1, %c2_i32_82 : i32
    %c0_83 = arith.constant 0 : index
    %85 = arith.index_cast %84 : i32 to index
    %c1_84 = arith.constant 1 : index
    %c0_85 = arith.constant 0 : index
    %86 = vector.load %arg2[%c0_83, %85, %c1_84, %c0_85] : memref<1x18x18x128xf32, #tpu.memory_space<vmem>>, vector<1x8x16x128xf32>
    %87 = vector.shape_cast %86 : vector<1x8x16x128xf32> to vector<8x16x128xf32>
    %c2_86 = arith.constant 2 : index
    %c1_87 = arith.constant 1 : index
    %c0_88 = arith.constant 0 : index
    %88 = vector.load %arg3[%c2_86, %c1_87, %c0_88] : memref<3x3x128xf32, #tpu.memory_space<vmem>>, vector<1x1x128xf32>
    %89 = vector.shape_cast %88 : vector<1x1x128xf32> to vector<128xf32>
    %90 = vector.shape_cast %89 : vector<128xf32> to vector<1x1x128xf32>
    %91 = vector.broadcast %90 : vector<1x1x128xf32> to vector<8x16x128xf32>
    %92 = arith.mulf %87, %91 : vector<8x16x128xf32>
    %c0_89 = arith.constant 0 : index
    %c0_90 = arith.constant 0 : index
    %c0_91 = arith.constant 0 : index
    %93 = vector.load %arg10[%c0_89, %c0_90, %c0_91] : memref<8x16x128xf32, #tpu.memory_space<vmem>>, vector<8x16x128xf32>
    %94 = arith.addf %93, %92 : vector<8x16x128xf32>
    %c0_92 = arith.constant 0 : index
    %c0_93 = arith.constant 0 : index
    %c0_94 = arith.constant 0 : index
    %95 = vector.load %arg10[%c0_92, %c0_93, %c0_94] : memref<8x16x128xf32, #tpu.memory_space<vmem>>, vector<8x16x128xf32>
    tpu.vector_store %arg10[%c0_92, %c0_93, %c0_94], %94 {strides = array<i32>} : memref<8x16x128xf32, #tpu.memory_space<vmem>>, vector<8x16x128xf32>,
    %c2_i32_95 = arith.constant 2 : i32
    %96 = arith.addi %1, %c2_i32_95 : i32
    %c0_96 = arith.constant 0 : index
    %97 = arith.index_cast %96 : i32 to index
    %c2_97 = arith.constant 2 : index
    %c0_98 = arith.constant 0 : index
    %98 = vector.load %arg2[%c0_96, %97, %c2_97, %c0_98] : memref<1x18x18x128xf32, #tpu.memory_space<vmem>>, vector<1x8x16x128xf32>
    %99 = vector.shape_cast %98 : vector<1x8x16x128xf32> to vector<8x16x128xf32>
    %c2_99 = arith.constant 2 : index
    %c2_100 = arith.constant 2 : index
    %c0_101 = arith.constant 0 : index
    %100 = vector.load %arg3[%c2_99, %c2_100, %c0_101] : memref<3x3x128xf32, #tpu.memory_space<vmem>>, vector<1x1x128xf32>
    %101 = vector.shape_cast %100 : vector<1x1x128xf32> to vector<128xf32>
    %102 = vector.shape_cast %101 : vector<128xf32> to vector<1x1x128xf32>
    %103 = vector.broadcast %102 : vector<1x1x128xf32> to vector<8x16x128xf32>
    %104 = arith.mulf %99, %103 : vector<8x16x128xf32>
    %c0_102 = arith.constant 0 : index
    %c0_103 = arith.constant 0 : index
    %c0_104 = arith.constant 0 : index
    %105 = vector.load %arg10[%c0_102, %c0_103, %c0_104] : memref<8x16x128xf32, #tpu.memory_space<vmem>>, vector<8x16x128xf32>
    %106 = arith.addf %105, %104 : vector<8x16x128xf32>
    %c0_105 = arith.constant 0 : index
    %c0_106 = arith.constant 0 : index
    %c0_107 = arith.constant 0 : index
    %107 = vector.load %arg10[%c0_105, %c0_106, %c0_107] : memref<8x16x128xf32, #tpu.memory_space<vmem>>, vector<8x16x128xf32>
    tpu.vector_store %arg10[%c0_105, %c0_106, %c0_107], %106 {strides = array<i32>} : memref<8x16x128xf32, #tpu.memory_space<vmem>>, vector<8x16x128xf32>,
    %c0_108 = arith.constant 0 : index
    %c0_109 = arith.constant 0 : index
    %c0_110 = arith.constant 0 : index
    %108 = vector.load %arg10[%c0_108, %c0_109, %c0_110] : memref<8x16x128xf32, #tpu.memory_space<vmem>>, vector<8x16x128xf32>
    %c0_111 = arith.constant 0 : index
    %c0_112 = arith.constant 0 : index
    %109 = vector.load %arg4[%c0_111, %c0_112] : memref<1x128xf32, #tpu.memory_space<vmem>>, vector<1x128xf32>
    %110 = vector.shape_cast %109 : vector<1x128xf32> to vector<128xf32>
    %111 = vector.shape_cast %110 : vector<128xf32> to vector<1x1x128xf32>
    %112 = vector.broadcast %111 : vector<1x1x128xf32> to vector<8x16x128xf32>
    %113 = arith.mulf %108, %112 : vector<8x16x128xf32>
    %c0_113 = arith.constant 0 : index
    %c0_114 = arith.constant 0 : index
    %114 = vector.load %arg5[%c0_113, %c0_114] : memref<1x128xf32, #tpu.memory_space<vmem>>, vector<1x128xf32>
    %115 = vector.shape_cast %114 : vector<1x128xf32> to vector<128xf32>
    %116 = vector.shape_cast %115 : vector<128xf32> to vector<1x1x128xf32>
    %117 = vector.broadcast %116 : vector<1x1x128xf32> to vector<8x16x128xf32>
    %118 = arith.addf %113, %117 : vector<8x16x128xf32>
    %cst = arith.constant 0.000000e+00 : f32
    %119 = vector.broadcast %cst : f32 to vector<8x16x128xf32>
    %120 = arith.maximumf %118, %119 : vector<8x16x128xf32>
    %121 = vector.shape_cast %120 : vector<8x16x128xf32> to vector<128x128xf32>
    %122 = arith.truncf %121 : vector<128x128xf32> to vector<128x128xbf16>
    %c0_115 = arith.constant 0 : index
    %c0_116 = arith.constant 0 : index
    %123 = vector.load %arg6[%c0_115, %c0_116] : memref<128x128xbf16, #tpu.memory_space<vmem>>, vector<128x128xbf16>
    %cst_117 = arith.constant dense<0.000000e+00> : vector<128x128xf32>
    %124 = tpu.matmul %122, %123, %cst_117 {dimension_numbers = #tpu.dot_dimension_numbers<[1], [0], [0], [1], [0, 0, 1, 1], [], []>} : vector<128x128xbf16>, vector<128x128xbf16>, vector<128x128xf32> -> vector<128x128xf32>
    %125 = vector.shape_cast %124 : vector<128x128xf32> to vector<8x16x128xf32>
    %c0_118 = arith.constant 0 : index
    %c0_119 = arith.constant 0 : index
    %126 = vector.load %arg7[%c0_118, %c0_119] : memref<1x128xf32, #tpu.memory_space<vmem>>, vector<1x128xf32>
    %127 = vector.shape_cast %126 : vector<1x128xf32> to vector<128xf32>
    %128 = vector.shape_cast %127 : vector<128xf32> to vector<1x1x128xf32>
    %129 = vector.broadcast %128 : vector<1x1x128xf32> to vector<8x16x128xf32>
    %130 = arith.mulf %125, %129 : vector<8x16x128xf32>
    %c0_120 = arith.constant 0 : index
    %c0_121 = arith.constant 0 : index
    %131 = vector.load %arg8[%c0_120, %c0_121] : memref<1x128xf32, #tpu.memory_space<vmem>>, vector<1x128xf32>
    %132 = vector.shape_cast %131 : vector<1x128xf32> to vector<128xf32>
    %133 = vector.shape_cast %132 : vector<128xf32> to vector<1x1x128xf32>
    %134 = vector.broadcast %133 : vector<1x1x128xf32> to vector<8x16x128xf32>
    %135 = arith.addf %130, %134 : vector<8x16x128xf32>
    %cst_122 = arith.constant 0.000000e+00 : f32
    %136 = vector.broadcast %cst_122 : f32 to vector<8x16x128xf32>
    %137 = arith.maximumf %135, %136 : vector<8x16x128xf32>
    %c0_123 = arith.constant 0 : index
    %c0_124 = arith.constant 0 : index
    %c0_125 = arith.constant 0 : index
    %c0_126 = arith.constant 0 : index
    %138 = vector.load %arg9[%c0_123, %c0_124, %c0_125, %c0_126] : memref<1x8x16x128xf32, #tpu.memory_space<vmem>>, vector<1x8x16x128xf32>
    %139 = vector.shape_cast %138 : vector<1x8x16x128xf32> to vector<8x16x128xf32>
    %140 = vector.shape_cast %137 : vector<8x16x128xf32> to vector<1x8x16x128xf32>
    tpu.vector_store %arg9[%c0_123, %c0_124, %c0_125, %c0_126], %140 {strides = array<i32>} : memref<1x8x16x128xf32, #tpu.memory_space<vmem>>, vector<1x8x16x128xf32>,
    return
  }
  func.func @transform_0(%arg0: i32, %arg1: i32) -> (i32, i32, i32, i32) {
    %c0_i32 = arith.constant 0 : i32
    %c0_i32_0 = arith.constant 0 : i32
    %c0_i32_1 = arith.constant 0 : i32
    %c0_i32_2 = arith.constant 0 : i32
    return %arg0, %c0_i32, %c0_i32_0, %c0_i32_1 : i32, i32, i32, i32
  }
  func.func @transform_1(%arg0: i32, %arg1: i32) -> (i32, i32, i32) {
    %c0_i32 = arith.constant 0 : i32
    %c0_i32_0 = arith.constant 0 : i32
    %c0_i32_1 = arith.constant 0 : i32
    %c0_i32_2 = arith.constant 0 : i32
    return %c0_i32, %c0_i32_0, %c0_i32_1 : i32, i32, i32
  }
  func.func @transform_2(%arg0: i32, %arg1: i32) -> (i32, i32) {
    %c0_i32 = arith.constant 0 : i32
    %c0_i32_0 = arith.constant 0 : i32
    %c0_i32_1 = arith.constant 0 : i32
    return %c0_i32, %c0_i32_0 : i32, i32
  }
  func.func @transform_3(%arg0: i32, %arg1: i32) -> (i32, i32) {
    %c0_i32 = arith.constant 0 : i32
    %c0_i32_0 = arith.constant 0 : i32
    %c0_i32_1 = arith.constant 0 : i32
    return %c0_i32, %c0_i32_0 : i32, i32
  }
  func.func @transform_4(%arg0: i32, %arg1: i32) -> (i32, i32) {
    %c0_i32 = arith.constant 0 : i32
    %c0_i32_0 = arith.constant 0 : i32
    %c0_i32_1 = arith.constant 0 : i32
    return %c0_i32, %c0_i32_0 : i32, i32
  }
  func.func @transform_5(%arg0: i32, %arg1: i32) -> (i32, i32) {
    %c0_i32 = arith.constant 0 : i32
    %c0_i32_0 = arith.constant 0 : i32
    %c0_i32_1 = arith.constant 0 : i32
    return %c0_i32, %c0_i32_0 : i32, i32
  }
  func.func @transform_6(%arg0: i32, %arg1: i32) -> (i32, i32) {
    %c0_i32 = arith.constant 0 : i32
    %c0_i32_0 = arith.constant 0 : i32
    %c0_i32_1 = arith.constant 0 : i32
    return %c0_i32, %c0_i32_0 : i32, i32
  }
  func.func @transform_7(%arg0: i32, %arg1: i32) -> (i32, i32, i32, i32) {
    %c0_i32 = arith.constant 0 : i32
    %c0_i32_0 = arith.constant 0 : i32
    %c0_i32_1 = arith.constant 0 : i32
    return %arg0, %arg1, %c0_i32, %c0_i32_0 : i32, i32, i32, i32
  }
}

</mosaic_0001>

<llo_original>
// kernel: tpu_custom_call.1
$region0: #{tpu_custom_call.1}
  #allocation0 [shape = 'u32[]', space=smem, size = 0x4, offset = 0x4, fixed_abs, tag = 'smem constant byte address 0x4 - core index']
  #allocation1 [shape = 'u32[144,128]{1,0:T(1,128)}', space=vmem, size = 0x12000, scoped, tag = 'internal scratch']
  #allocation2 [shape = 'f32[8,16,128]{2,1,0:T(8,128)}', space=vmem, size = 0x10000, scoped, tag = 'scratch operand']
  %s0 = inlined_call_operand.vmem [shape: f32[2,18,18,128], index: 0, kind: input, shape index: {}]
  %s1 = inlined_call_operand.vmem [shape: f32[3,3,128], index: 1, kind: input, shape index: {}]
  %s2 = inlined_call_operand.vmem [shape: f32[1,128], index: 2, kind: input, shape index: {}]
  %s3 = inlined_call_operand.vmem [shape: f32[1,128], index: 3, kind: input, shape index: {}]
  %s4 = inlined_call_operand.vmem [shape: bf16[128,128], index: 4, kind: input, shape index: {}]
  %s5 = inlined_call_operand.vmem [shape: f32[1,128], index: 5, kind: input, shape index: {}]
  %s6 = inlined_call_operand.vmem [shape: f32[1,128], index: 6, kind: input, shape index: {}]
  %s7 = inlined_call_operand.hbm [shape: f32[2,16,16,128], index: 7, kind: output, shape index: {}]
  %s8 = sld [smem:[#allocation0]]
  $region61: #{tpu_custom_call.1} parent=0
    _
  %s10 = ssub.s32 1, %s8
  %s11 = scalar_select 0, %s10, %s8
  $region1: #{tpu_custom_call.1} parent=0
    #allocation3 [shape = 'u8[131072]{0}', space=vmem, size = 0x20000, scoped, tag = 'output window, operand 0']
    #allocation4 [shape = 's32[2]{0}', space=sflag, size = 0x8, scoped, tag = 'scoped memory for tpu_custom_call.1']
    %12 = vsyncpa [#allocation4], 0
    %s13 = scalar_lea.sflag [#allocation4], 1
    %14 = vsyncpa %s13, 0
    loop: start=0, step=1, limit=6
    $region2: #{tpu_custom_call.1} parent=1 // loop_pre_header
      _
    $region3: #{tpu_custom_call.1} parent=1 // loop_header
      %s16 = sphi 0, %s20
      %p17 = scmp.ge.s32.totalorder %s16, 6
      %s23 = sphi 0, %s35
      %s24 = sphi 0, %s31
      %s25 = sphi 0, %s23
      %s26 = sphi 0, %s24
      %s27 = sphi 0, %s25
      %s28 = sphi 0, %s26
      %s38 = sphi 0, %s40
      %s41 = sphi 0, %s38
      %s42 = sphi 0, %s41
      %s58 = sphi 0, %s42
      %s62 = sphi 0, %s62
      %s64 = sphi 0, %s62
      %s65 = sphi 0, %s64
      %s79 = sphi 0, %s65
      %s83 = sphi 0, %s83
      %s85 = sphi 0, %s83
      %s86 = sphi 0, %s85
      %s100 = sphi 0, %s86
      %s104 = sphi 0, %s104
      %s106 = sphi 0, %s104
      %s107 = sphi 0, %s106
      %s121 = sphi 0, %s107
      %s125 = sphi 0, %s125
      %s127 = sphi 0, %s125
      %s128 = sphi 0, %s127
      %s142 = sphi 0, %s128
      %s146 = sphi 0, %s146
      %s148 = sphi 0, %s146
      %s149 = sphi 0, %s148
      %s163 = sphi 0, %s149
      %s167 = sphi 0, %s167
      %s169 = sphi 0, %s167
      %s170 = sphi 0, %s169
      %s184 = sphi 0, %s170
      %s192 = sphi 0, %s194
      %s195 = sphi 0, %s192
      %s196 = sphi 0, %s195
      %s212 = sphi 0, %s196
    $region4: #{tpu_custom_call.1} parent=1 // loop_header_branch
      %19 = sbr.rel (%p17) target = $region8
    $region5: #{tpu_custom_call.1} parent=1 // loop_body
      %s21 = ssub.s32 %s16, 1
      %s22 = ssub.s32 %s16, 2
      %s29 = sadd.s32 1, %s24
      %p30 = scmp.ge.s32.totalorder %s29, 2
      %s31 = scalar_select %p30, 0, %s29
      %s32 = sadd.s32 1, %s23
      %s33 = scalar_select %p30, %s32, %s23
      %p34 = scmp.ge.s32.totalorder %s33, 2
      %s35 = scalar_select %p34, 0, %s33
      %s36 = ssub.s32 %s23, %s35
      %p37 = scmp.eq.s32.totalorder %s36, 0
      %s39 = sadd.s32 %s38, 1
      %s40 = scalar_select %p37, %s38, %s39
      %p43 = pneg %p37
      %p44 = scmp.eq.s32.totalorder %s16, 3
      %p45 = por %p43, %p44
      %p46 = scmp.ne.s32.totalorder %s38, %s41
      %p47 = scmp.eq.s32.totalorder %s16, 0
      %p48 = por %p46, %p47
      %p49 = scmp.ne.s32.totalorder %s38, %s41
      %p50 = scmp.eq.s32.totalorder %s21, 3
      %p51 = por %p49, %p50
      %p52 = scmp.ne.s32.totalorder %s41, %s42
      %p53 = scmp.eq.s32.totalorder %s21, 0
      %p54 = por %p52, %p53
      %p55 = scmp.ne.s32.totalorder %s41, %s42
      %p56 = scmp.eq.s32.totalorder %s22, 3
      %p57 = por %p55, %p56
      %p59 = scmp.ne.s32.totalorder %s42, %s58
      %p60 = scmp.eq.s32.totalorder %s22, 0
      %p61 = por %p59, %p60
      %s63 = sadd.s32 %s62, 1
      %p66 = scmp.eq.s32.totalorder %s16, 3
      %p67 = scmp.ne.s32.totalorder %s62, %s64
      %p68 = scmp.eq.s32.totalorder %s16, 0
      %p69 = por %p67, %p68
      %p70 = scmp.ne.s32.totalorder %s62, %s64
      %p71 = scmp.eq.s32.totalorder %s21, 3
      %p72 = por %p70, %p71
      %p73 = scmp.ne.s32.totalorder %s64, %s65
      %p74 = scmp.eq.s32.totalorder %s21, 0
      %p75 = por %p73, %p74
      %p76 = scmp.ne.s32.totalorder %s64, %s65
      %p77 = scmp.eq.s32.totalorder %s22, 3
      %p78 = por %p76, %p77
      %p80 = scmp.ne.s32.totalorder %s65, %s79
      %p81 = scmp.eq.s32.totalorder %s22, 0
      %p82 = por %p80, %p81
      %s84 = sadd.s32 %s83, 1
      %p87 = scmp.eq.s32.totalorder %s16, 3
      %p88 = scmp.ne.s32.totalorder %s83, %s85
      %p89 = scmp.eq.s32.totalorder %s16, 0
      %p90 = por %p88, %p89
      %p91 = scmp.ne.s32.totalorder %s83, %s85
      %p92 = scmp.eq.s32.totalorder %s21, 3
      %p93 = por %p91, %p92
      %p94 = scmp.ne.s32.totalorder %s85, %s86
      %p95 = scmp.eq.s32.totalorder %s21, 0
      %p96 = por %p94, %p95
      %p97 = scmp.ne.s32.totalorder %s85, %s86
      %p98 = scmp.eq.s32.totalorder %s22, 3
      %p99 = por %p97, %p98
      %p101 = scmp.ne.s32.totalorder %s86, %s100
      %p102 = scmp.eq.s32.totalorder %s22, 0
      %p103 = por %p101, %p102
      %s105 = sadd.s32 %s104, 1
      %p108 = scmp.eq.s32.totalorder %s16, 3
      %p109 = scmp.ne.s32.totalorder %s104, %s106
      %p110 = scmp.eq.s32.totalorder %s16, 0
      %p111 = por %p109, %p110
      %p112 = scmp.ne.s32.totalorder %s104, %s106
      %p113 = scmp.eq.s32.totalorder %s21, 3
      %p114 = por %p112, %p113
      %p115 = scmp.ne.s32.totalorder %s106, %s107
      %p116 = scmp.eq.s32.totalorder %s21, 0
      %p117 = por %p115, %p116
      %p118 = scmp.ne.s32.totalorder %s106, %s107
      %p119 = scmp.eq.s32.totalorder %s22, 3
      %p120 = por %p118, %p119
      %p122 = scmp.ne.s32.totalorder %s107, %s121
      %p123 = scmp.eq.s32.totalorder %s22, 0
      %p124 = por %p122, %p123
      %s126 = sadd.s32 %s125, 1
      %p129 = scmp.eq.s32.totalorder %s16, 3
      %p130 = scmp.ne.s32.totalorder %s125, %s127
      %p131 = scmp.eq.s32.totalorder %s16, 0
      %p132 = por %p130, %p131
      %p133 = scmp.ne.s32.totalorder %s125, %s127
      %p134 = scmp.eq.s32.totalorder %s21, 3
      %p135 = por %p133, %p134
      %p136 = scmp.ne.s32.totalorder %s127, %s128
      %p137 = scmp.eq.s32.totalorder %s21, 0
      %p138 = por %p136, %p137
      %p139 = scmp.ne.s32.totalorder %s127, %s128
      %p140 = scmp.eq.s32.totalorder %s22, 3
      %p141 = por %p139, %p140
      %p143 = scmp.ne.s32.totalorder %s128, %s142
      %p144 = scmp.eq.s32.totalorder %s22, 0
      %p145 = por %p143, %p144
      %s147 = sadd.s32 %s146, 1
      %p150 = scmp.eq.s32.totalorder %s16, 3
      %p151 = scmp.ne.s32.totalorder %s146, %s148
      %p152 = scmp.eq.s32.totalorder %s16, 0
      %p153 = por %p151, %p152
      %p154 = scmp.ne.s32.totalorder %s146, %s148
      %p155 = scmp.eq.s32.totalorder %s21, 3
      %p156 = por %p154, %p155
      %p157 = scmp.ne.s32.totalorder %s148, %s149
      %p158 = scmp.eq.s32.totalorder %s21, 0
      %p159 = por %p157, %p158
      %p160 = scmp.ne.s32.totalorder %s148, %s149
      %p161 = scmp.eq.s32.totalorder %s22, 3
      %p162 = por %p160, %p161
      %p164 = scmp.ne.s32.totalorder %s149, %s163
      %p165 = scmp.eq.s32.totalorder %s22, 0
      %p166 = por %p164, %p165
      %s168 = sadd.s32 %s167, 1
      %p171 = scmp.eq.s32.totalorder %s16, 3
      %p172 = scmp.ne.s32.totalorder %s167, %s169
      %p173 = scmp.eq.s32.totalorder %s16, 0
      %p174 = por %p172, %p173
      %p175 = scmp.ne.s32.totalorder %s167, %s169
      %p176 = scmp.eq.s32.totalorder %s21, 3
      %p177 = por %p175, %p176
      %p178 = scmp.ne.s32.totalorder %s169, %s170
      %p179 = scmp.eq.s32.totalorder %s21, 0
      %p180 = por %p178, %p179
      %p181 = scmp.ne.s32.totalorder %s169, %s170
      %p182 = scmp.eq.s32.totalorder %s22, 3
      %p183 = por %p181, %p182
      %p185 = scmp.ne.s32.totalorder %s170, %s184
      %p186 = scmp.eq.s32.totalorder %s22, 0
      %p187 = por %p185, %p186
      %s188 = ssub.s32 %s23, %s35
      %s189 = ssub.s32 %s24, %s31
      %s190 = sor.u32 %s188, %s189
      %p191 = scmp.eq.s32.totalorder %s190, 0
      %s193 = sadd.s32 %s192, 1
      %s194 = scalar_select %p191, %s192, %s193
      %p197 = pneg %p191
      %p198 = scmp.eq.s32.totalorder %s16, 3
      %p199 = por %p197, %p198
      %p200 = scmp.ne.s32.totalorder %s192, %s195
      %p201 = scmp.eq.s32.totalorder %s16, 0
      %p202 = por %p200, %p201
      %p203 = scmp.ne.s32.totalorder %s192, %s195
      %p204 = scmp.eq.s32.totalorder %s21, 3
      %p205 = por %p203, %p204
      %p206 = scmp.ne.s32.totalorder %s195, %s196
      %p207 = scmp.eq.s32.totalorder %s21, 0
      %p208 = por %p206, %p207
      %p209 = scmp.ne.s32.totalorder %s195, %s196
      %p210 = scmp.eq.s32.totalorder %s22, 3
      %p211 = por %p209, %p210
      %p213 = scmp.ne.s32.totalorder %s196, %s212
      %p214 = scmp.eq.s32.totalorder %s22, 0
      %p215 = por %p213, %p214
      %p216 = scmp.le.s32.totalorder 1, %s16
      %p217 = scmp.lt.s32.totalorder %s16, 5
      %p218 = pnand %p216, %p217
      %p219 = pneg %p218
      // Predicated region
      $region9: #{tpu_custom_call.1} parent=5 // pred_check
        _
      $region10: #{tpu_custom_call.1} parent=5 // pred_check_branch
        %221 = sbr.rel (%p218) target = $region12
      $region11: #{tpu_custom_call.1} parent=5 // pred_region
        %s222 = ssub.s32 %s16, 1
        // Predicated region
        $region13: #{tpu_custom_call.1} parent=11 // pred_check
          %p223 = pneg %p75
        $region14: #{tpu_custom_call.1} parent=11 // pred_check_branch
          %225 = sbr.rel (%p223) target = $region16
        $region15: #{tpu_custom_call.1} parent=11 // pred_region
          _
        $region16: #{tpu_custom_call.1} parent=11 // pred_fallthru
          _
        // Predicated region
        $region17: #{tpu_custom_call.1} parent=11 // pred_check
          %p226 = pneg %p96
        $region18: #{tpu_custom_call.1} parent=11 // pred_check_branch
          %228 = sbr.rel (%p226) target = $region20
        $region19: #{tpu_custom_call.1} parent=11 // pred_region
          _
        $region20: #{tpu_custom_call.1} parent=11 // pred_fallthru
          _
        // Predicated region
        $region21: #{tpu_custom_call.1} parent=11 // pred_check
          %p229 = pneg %p117
        $region22: #{tpu_custom_call.1} parent=11 // pred_check_branch
          %231 = sbr.rel (%p229) target = $region24
        $region23: #{tpu_custom_call.1} parent=11 // pred_region
          _
        $region24: #{tpu_custom_call.1} parent=11 // pred_fallthru
          _
        // Predicated region
        $region25: #{tpu_custom_call.1} parent=11 // pred_check
          %p232 = pneg %p138
        $region26: #{tpu_custom_call.1} parent=11 // pred_check_branch
          %234 = sbr.rel (%p232) target = $region28
        $region27: #{tpu_custom_call.1} parent=11 // pred_region
          _
        $region28: #{tpu_custom_call.1} parent=11 // pred_fallthru
          _
        // Predicated region
        $region29: #{tpu_custom_call.1} parent=11 // pred_check
          %p235 = pneg %p159
        $region30: #{tpu_custom_call.1} parent=11 // pred_check_branch
          %237 = sbr.rel (%p235) target = $region32
        $region31: #{tpu_custom_call.1} parent=11 // pred_region
          _
        $region32: #{tpu_custom_call.1} parent=11 // pred_fallthru
          _
        // Predicated region
        $region33: #{tpu_custom_call.1} parent=11 // pred_check
          %p238 = pneg %p180
        $region34: #{tpu_custom_call.1} parent=11 // pred_check_branch
          %240 = sbr.rel (%p238) target = $region36
        $region35: #{tpu_custom_call.1} parent=11 // pred_region
          _
        $region36: #{tpu_custom_call.1} parent=11 // pred_fallthru
          _
      $region12: #{tpu_custom_call.1} parent=5 // pred_fallthru
        _
      %p241 = scmp.lt.s32.totalorder %s16, 4
      // Predicated region
      $region37: #{tpu_custom_call.1} parent=5 // pred_check
        %p242 = pneg %p241
      $region38: #{tpu_custom_call.1} parent=5 // pred_check_branch
        %244 = sbr.rel (%p242) target = $region40
      $region39: #{tpu_custom_call.1} parent=5 // pred_region
        // Predicated region
        $region41: #{tpu_custom_call.1} parent=39 // pred_check
          %p245 = pneg %p48
        $region42: #{tpu_custom_call.1} parent=39 // pred_check_branch
          %247 = sbr.rel (%p245) target = $region44
        $region43: #{tpu_custom_call.1} parent=39 // pred_region
          %p248 = scmp.lt.s32.totalorder %s23, 1
          %s249 = scalar_select %p248, %s23, 1
          %s250 = smul.addr %s249, 54
          %s251 = smul.addr %s250, 8
          %s252 = scalar_lea.vmem %s0, %s251
        $region44: #{tpu_custom_call.1} parent=39 // pred_fallthru
          _
      $region40: #{tpu_custom_call.1} parent=5 // pred_fallthru
        _
      %p253 = scmp.le.s32.totalorder 1, %s16
      %p254 = scmp.lt.s32.totalorder %s16, 5
      %p255 = pnand %p253, %p254
      %p256 = pneg %p255
      // Predicated region
      $region45: #{tpu_custom_call.1} parent=5 // pred_check
        _
      $region46: #{tpu_custom_call.1} parent=5 // pred_check_branch
        %258 = sbr.rel (%p255) target = $region48
      $region47: #{tpu_custom_call.1} parent=5 // pred_region
        %s259 = ssub.s32 %s16, 1
        %p260 = scmp.lt.s32.totalorder %s25, 1
        %s261 = scalar_select %p260, %s25, 1
        %s262 = smul.addr %s261, 54
        %s263 = smul.addr %s262, 8
        %s264 = scalar_lea.vmem %s0, %s263
        %p265 = pneg %p54
        %p266 = pneg %p51
        %p267 = pneg %p75
        %p268 = pneg %p72
        %p269 = pneg %p96
        %p270 = pneg %p93
        %p271 = pneg %p117
        %p272 = pneg %p114
        %p273 = pneg %p138
        %p274 = pneg %p135
        %p275 = pneg %p159
        %p276 = pneg %p156
        %p277 = pneg %p180
        %p278 = pneg %p177
        %p279 = pneg %p208
        %p280 = pneg %p205
        %s281 = sand.u32 %s195, 1
        %s282 = scalar_lea.sflag [#allocation4], %s281
        %s283 = sand.u32 %s195, 1
        %s284 = smul.addr %s283, 128
        %s285 = scalar_lea.vmem [#allocation3], %s284
        %p286 = scmp.lt.s32.totalorder %s25, 1
        %s287 = scalar_select %p286, %s25, 1
        %s288 = smul.addr %s287, 54
        %s289 = smul.addr %s288, 8
        %s290 = scalar_lea.vmem %s0, %s289
        %s291 = smul.u32 8, %s26
        %s293 = smul.u32 %s26, 8
        %s294 = smul.u32 %s293, 24
        %s295 = scalar_lea.vmem %s290, %s294
        %v296 = vld [vmem:[%s295] sm:$0xff]
        %v297 = vld [vmem:[%s295 + $0x8] sm:$0xff]
        %v298 = vld [vmem:[%s295 + $0x18] sm:$0xff]
        %v299 = vld [vmem:[%s295 + $0x20] sm:$0xff]
        %v300 = vld [vmem:[%s295 + $0x30] sm:$0xff]
        %v301 = vld [vmem:[%s295 + $0x38] sm:$0xff]
        %v302 = vld [vmem:[%s295 + $0x48] sm:$0xff]
        %v303 = vld [vmem:[%s295 + $0x50] sm:$0xff]
        %v304 = vld [vmem:[%s295 + $0x60] sm:$0xff]
        %v305 = vld [vmem:[%s295 + $0x68] sm:$0xff]
        %v306 = vld [vmem:[%s295 + $0x78] sm:$0xff]
        %v307 = vld [vmem:[%s295 + $0x80] sm:$0xff]
        %v308 = vld [vmem:[%s295 + $0x90] sm:$0xff]
        %v309 = vld [vmem:[%s295 + $0x98] sm:$0xff]
        %v310 = vld [vmem:[%s295 + $0xa8] sm:$0xff]
        %v311 = vld [vmem:[%s295 + $0xb0] sm:$0xff]
        %v312 = vld [vmem:[%s1] sm:$0x1]
        %v313 = vlaneseq
        %v314 = vshrl.u32 %v313, 7
        %v315 = vsub.s32 0, %v314
        %v316 = vrot.slane %v312, %v315
        %v317 = vmul.f32 %v296, %v316
        %v318 = vmul.f32 %v297, %v316
        %v319 = vmul.f32 %v298, %v316
        %v320 = vmul.f32 %v299, %v316
        %v321 = vmul.f32 %v300, %v316
        %v322 = vmul.f32 %v301, %v316
        %v323 = vmul.f32 %v302, %v316
        %v324 = vmul.f32 %v303, %v316
        %v325 = vmul.f32 %v304, %v316
        %v326 = vmul.f32 %v305, %v316
        %v327 = vmul.f32 %v306, %v316
        %v328 = vmul.f32 %v307, %v316
        %v329 = vmul.f32 %v308, %v316
        %v330 = vmul.f32 %v309, %v316
        %v331 = vmul.f32 %v310, %v316
        %v332 = vmul.f32 %v311, %v316
        %333 = vst [vmem:[#allocation2] sm:$0xff] %v317
        %334 = vst [vmem:[#allocation2 + $0x8] sm:$0xff] %v318
        %335 = vst [vmem:[#allocation2 + $0x10] sm:$0xff] %v319
        %336 = vst [vmem:[#allocation2 + $0x18] sm:$0xff] %v320
        %337 = vst [vmem:[#allocation2 + $0x20] sm:$0xff] %v321
        %338 = vst [vmem:[#allocation2 + $0x28] sm:$0xff] %v322
        %339 = vst [vmem:[#allocation2 + $0x30] sm:$0xff] %v323
        %340 = vst [vmem:[#allocation2 + $0x38] sm:$0xff] %v324
        %341 = vst [vmem:[#allocation2 + $0x40] sm:$0xff] %v325
        %342 = vst [vmem:[#allocation2 + $0x48] sm:$0xff] %v326
        %343 = vst [vmem:[#allocation2 + $0x50] sm:$0xff] %v327
        %344 = vst [vmem:[#allocation2 + $0x58] sm:$0xff] %v328
        %345 = vst [vmem:[#allocation2 + $0x60] sm:$0xff] %v329
        %346 = vst [vmem:[#allocation2 + $0x68] sm:$0xff] %v330
        %347 = vst [vmem:[#allocation2 + $0x70] sm:$0xff] %v331
        %348 = vst [vmem:[#allocation2 + $0x78] sm:$0xff] %v332
        %v349 = vld [vmem:[%s295 + $0x1] sm:$0xff]
        %v350 = vld [vmem:[%s295 + $0x9] sm:$0xff]
        %v351 = vld [vmem:[%s295 + $0x19] sm:$0xff]
        %v352 = vld [vmem:[%s295 + $0x21] sm:$0xff]
        %v353 = vld [vmem:[%s295 + $0x31] sm:$0xff]
        %v354 = vld [vmem:[%s295 + $0x39] sm:$0xff]
        %v355 = vld [vmem:[%s295 + $0x49] sm:$0xff]
        %v356 = vld [vmem:[%s295 + $0x51] sm:$0xff]
        %v357 = vld [vmem:[%s295 + $0x61] sm:$0xff]
        %v358 = vld [vmem:[%s295 + $0x69] sm:$0xff]
        %v359 = vld [vmem:[%s295 + $0x79] sm:$0xff]
        %v360 = vld [vmem:[%s295 + $0x81] sm:$0xff]
        %v361 = vld [vmem:[%s295 + $0x91] sm:$0xff]
        %v362 = vld [vmem:[%s295 + $0x99] sm:$0xff]
        %v363 = vld [vmem:[%s295 + $0xa9] sm:$0xff]
        %v364 = vld [vmem:[%s295 + $0xb1] sm:$0xff]
        %v365 = vld [vmem:[%s1 + $0x1] sm:$0x1]
        %v366 = vlaneseq
        %v367 = vshrl.u32 %v366, 7
        %v368 = vsub.s32 0, %v367
        %v369 = vrot.slane %v365, %v368
        %v370 = vmul.f32 %v349, %v369
        %v371 = vmul.f32 %v350, %v369
        %v372 = vmul.f32 %v351, %v369
        %v373 = vmul.f32 %v352, %v369
        %v374 = vmul.f32 %v353, %v369
        %v375 = vmul.f32 %v354, %v369
        %v376 = vmul.f32 %v355, %v369
        %v377 = vmul.f32 %v356, %v369
        %v378 = vmul.f32 %v357, %v369
        %v379 = vmul.f32 %v358, %v369
        %v380 = vmul.f32 %v359, %v369
        %v381 = vmul.f32 %v360, %v369
        %v382 = vmul.f32 %v361, %v369
        %v383 = vmul.f32 %v362, %v369
        %v384 = vmul.f32 %v363, %v369
        %v385 = vmul.f32 %v364, %v369
        %v386 = vld [vmem:[#allocation2] sm:$0xff]
        %v387 = vld [vmem:[#allocation2 + $0x8] sm:$0xff]
        %v388 = vld [vmem:[#allocation2 + $0x10] sm:$0xff]
        %v389 = vld [vmem:[#allocation2 + $0x18] sm:$0xff]
        %v390 = vld [vmem:[#allocation2 + $0x20] sm:$0xff]
        %v391 = vld [vmem:[#allocation2 + $0x28] sm:$0xff]
        %v392 = vld [vmem:[#allocation2 + $0x30] sm:$0xff]
        %v393 = vld [vmem:[#allocation2 + $0x38] sm:$0xff]
        %v394 = vld [vmem:[#allocation2 + $0x40] sm:$0xff]
        %v395 = vld [vmem:[#allocation2 + $0x48] sm:$0xff]
        %v396 = vld [vmem:[#allocation2 + $0x50] sm:$0xff]
        %v397 = vld [vmem:[#allocation2 + $0x58] sm:$0xff]
        %v398 = vld [vmem:[#allocation2 + $0x60] sm:$0xff]
        %v399 = vld [vmem:[#allocation2 + $0x68] sm:$0xff]
        %v400 = vld [vmem:[#allocation2 + $0x70] sm:$0xff]
        %v401 = vld [vmem:[#allocation2 + $0x78] sm:$0xff]
        %v402 = vadd.f32 %v386, %v370
        %v403 = vadd.f32 %v387, %v371
        %v404 = vadd.f32 %v388, %v372
        %v405 = vadd.f32 %v389, %v373
        %v406 = vadd.f32 %v390, %v374
        %v407 = vadd.f32 %v391, %v375
        %v408 = vadd.f32 %v392, %v376
        %v409 = vadd.f32 %v393, %v377
        %v410 = vadd.f32 %v394, %v378
        %v411 = vadd.f32 %v395, %v379
        %v412 = vadd.f32 %v396, %v380
        %v413 = vadd.f32 %v397, %v381
        %v414 = vadd.f32 %v398, %v382
        %v415 = vadd.f32 %v399, %v383
        %v416 = vadd.f32 %v400, %v384
        %v417 = vadd.f32 %v401, %v385
        %418 = vst [vmem:[#allocation2] sm:$0xff] %v402
        %419 = vst [vmem:[#allocation2 + $0x8] sm:$0xff] %v403
        %420 = vst [vmem:[#allocation2 + $0x10] sm:$0xff] %v404
        %421 = vst [vmem:[#allocation2 + $0x18] sm:$0xff] %v405
        %422 = vst [vmem:[#allocation2 + $0x20] sm:$0xff] %v406
        %423 = vst [vmem:[#allocation2 + $0x28] sm:$0xff] %v407
        %424 = vst [vmem:[#allocation2 + $0x30] sm:$0xff] %v408
        %425 = vst [vmem:[#allocation2 + $0x38] sm:$0xff] %v409
        %426 = vst [vmem:[#allocation2 + $0x40] sm:$0xff] %v410
        %427 = vst [vmem:[#allocation2 + $0x48] sm:$0xff] %v411
        %428 = vst [vmem:[#allocation2 + $0x50] sm:$0xff] %v412
        %429 = vst [vmem:[#allocation2 + $0x58] sm:$0xff] %v413
        %430 = vst [vmem:[#allocation2 + $0x60] sm:$0xff] %v414
        %431 = vst [vmem:[#allocation2 + $0x68] sm:$0xff] %v415
        %432 = vst [vmem:[#allocation2 + $0x70] sm:$0xff] %v416
        %433 = vst [vmem:[#allocation2 + $0x78] sm:$0xff] %v417
        %v434 = vld [vmem:[%s295 + $0x2] sm:$0xff]
        %v435 = vld [vmem:[%s295 + $0xa] sm:$0xff]
        %v436 = vld [vmem:[%s295 + $0x1a] sm:$0xff]
        %v437 = vld [vmem:[%s295 + $0x22] sm:$0xff]
        %v438 = vld [vmem:[%s295 + $0x32] sm:$0xff]
        %v439 = vld [vmem:[%s295 + $0x3a] sm:$0xff]
        %v440 = vld [vmem:[%s295 + $0x4a] sm:$0xff]
        %v441 = vld [vmem:[%s295 + $0x52] sm:$0xff]
        %v442 = vld [vmem:[%s295 + $0x62] sm:$0xff]
        %v443 = vld [vmem:[%s295 + $0x6a] sm:$0xff]
        %v444 = vld [vmem:[%s295 + $0x7a] sm:$0xff]
        %v445 = vld [vmem:[%s295 + $0x82] sm:$0xff]
        %v446 = vld [vmem:[%s295 + $0x92] sm:$0xff]
        %v447 = vld [vmem:[%s295 + $0x9a] sm:$0xff]
        %v448 = vld [vmem:[%s295 + $0xaa] sm:$0xff]
        %v449 = vld [vmem:[%s295 + $0xb2] sm:$0xff]
        %v450 = vld [vmem:[%s1 + $0x2] sm:$0x1]
        %v451 = vlaneseq
        %v452 = vshrl.u32 %v451, 7
        %v453 = vsub.s32 0, %v452
        %v454 = vrot.slane %v450, %v453
        %v455 = vmul.f32 %v434, %v454
        %v456 = vmul.f32 %v435, %v454
        %v457 = vmul.f32 %v436, %v454
        %v458 = vmul.f32 %v437, %v454
        %v459 = vmul.f32 %v438, %v454
        %v460 = vmul.f32 %v439, %v454
        %v461 = vmul.f32 %v440, %v454
        %v462 = vmul.f32 %v441, %v454
        %v463 = vmul.f32 %v442, %v454
        %v464 = vmul.f32 %v443, %v454
        %v465 = vmul.f32 %v444, %v454
        %v466 = vmul.f32 %v445, %v454
        %v467 = vmul.f32 %v446, %v454
        %v468 = vmul.f32 %v447, %v454
        %v469 = vmul.f32 %v448, %v454
        %v470 = vmul.f32 %v449, %v454
        %v471 = vld [vmem:[#allocation2] sm:$0xff]
        %v472 = vld [vmem:[#allocation2 + $0x8] sm:$0xff]
        %v473 = vld [vmem:[#allocation2 + $0x10] sm:$0xff]
        %v474 = vld [vmem:[#allocation2 + $0x18] sm:$0xff]
        %v475 = vld [vmem:[#allocation2 + $0x20] sm:$0xff]
        %v476 = vld [vmem:[#allocation2 + $0x28] sm:$0xff]
        %v477 = vld [vmem:[#allocation2 + $0x30] sm:$0xff]
        %v478 = vld [vmem:[#allocation2 + $0x38] sm:$0xff]
        %v479 = vld [vmem:[#allocation2 + $0x40] sm:$0xff]
        %v480 = vld [vmem:[#allocation2 + $0x48] sm:$0xff]
        %v481 = vld [vmem:[#allocation2 + $0x50] sm:$0xff]
        %v482 = vld [vmem:[#allocation2 + $0x58] sm:$0xff]
        %v483 = vld [vmem:[#allocation2 + $0x60] sm:$0xff]
        %v484 = vld [vmem:[#allocation2 + $0x68] sm:$0xff]
        %v485 = vld [vmem:[#allocation2 + $0x70] sm:$0xff]
        %v486 = vld [vmem:[#allocation2 + $0x78] sm:$0xff]
        %v487 = vadd.f32 %v471, %v455
        %v488 = vadd.f32 %v472, %v456
        %v489 = vadd.f32 %v473, %v457
        %v490 = vadd.f32 %v474, %v458
        %v491 = vadd.f32 %v475, %v459
        %v492 = vadd.f32 %v476, %v460
        %v493 = vadd.f32 %v477, %v461
        %v494 = vadd.f32 %v478, %v462
        %v495 = vadd.f32 %v479, %v463
        %v496 = vadd.f32 %v480, %v464
        %v497 = vadd.f32 %v481, %v465
        %v498 = vadd.f32 %v482, %v466
        %v499 = vadd.f32 %v483, %v467
        %v500 = vadd.f32 %v484, %v468
        %v501 = vadd.f32 %v485, %v469
        %v502 = vadd.f32 %v486, %v470
        %503 = vst [vmem:[#allocation2] sm:$0xff] %v487
        %504 = vst [vmem:[#allocation2 + $0x8] sm:$0xff] %v488
        %505 = vst [vmem:[#allocation2 + $0x10] sm:$0xff] %v489
        %506 = vst [vmem:[#allocation2 + $0x18] sm:$0xff] %v490
        %507 = vst [vmem:[#allocation2 + $0x20] sm:$0xff] %v491
        %508 = vst [vmem:[#allocation2 + $0x28] sm:$0xff] %v492
        %509 = vst [vmem:[#allocation2 + $0x30] sm:$0xff] %v493
        %510 = vst [vmem:[#allocation2 + $0x38] sm:$0xff] %v494
        %511 = vst [vmem:[#allocation2 + $0x40] sm:$0xff] %v495
        %512 = vst [vmem:[#allocation2 + $0x48] sm:$0xff] %v496
        %513 = vst [vmem:[#allocation2 + $0x50] sm:$0xff] %v497
        %514 = vst [vmem:[#allocation2 + $0x58] sm:$0xff] %v498
        %515 = vst [vmem:[#allocation2 + $0x60] sm:$0xff] %v499
        %516 = vst [vmem:[#allocation2 + $0x68] sm:$0xff] %v500
        %517 = vst [vmem:[#allocation2 + $0x70] sm:$0xff] %v501
        %518 = vst [vmem:[#allocation2 + $0x78] sm:$0xff] %v502
        %s519 = sadd.s32 %s293, 1
        %s520 = smul.u32 %s519, 24
        %s521 = scalar_lea.vmem %s290, %s520
        %v522 = vld [vmem:[%s521] sm:$0xff]
        %v523 = vld [vmem:[%s521 + $0x8] sm:$0xff]
        %v524 = vld [vmem:[%s521 + $0x18] sm:$0xff]
        %v525 = vld [vmem:[%s521 + $0x20] sm:$0xff]
        %v526 = vld [vmem:[%s521 + $0x30] sm:$0xff]
        %v527 = vld [vmem:[%s521 + $0x38] sm:$0xff]
        %v528 = vld [vmem:[%s521 + $0x48] sm:$0xff]
        %v529 = vld [vmem:[%s521 + $0x50] sm:$0xff]
        %v530 = vld [vmem:[%s521 + $0x60] sm:$0xff]
        %v531 = vld [vmem:[%s521 + $0x68] sm:$0xff]
        %v532 = vld [vmem:[%s521 + $0x78] sm:$0xff]
        %v533 = vld [vmem:[%s521 + $0x80] sm:$0xff]
        %v534 = vld [vmem:[%s521 + $0x90] sm:$0xff]
        %v535 = vld [vmem:[%s521 + $0x98] sm:$0xff]
        %v536 = vld [vmem:[%s521 + $0xa8] sm:$0xff]
        %v537 = vld [vmem:[%s521 + $0xb0] sm:$0xff]
        %s538 = scalar_lea.vmem %s1, 4
        %v539 = vld [vmem:[%s538] sm:$0x1]
        %v540 = vlaneseq
        %v541 = vshrl.u32 %v540, 7
        %v542 = vsub.s32 0, %v541
        %v543 = vrot.slane %v539, %v542
        %v544 = vmul.f32 %v522, %v543
        %v545 = vmul.f32 %v523, %v543
        %v546 = vmul.f32 %v524, %v543
        %v547 = vmul.f32 %v525, %v543
        %v548 = vmul.f32 %v526, %v543
        %v549 = vmul.f32 %v527, %v543
        %v550 = vmul.f32 %v528, %v543
        %v551 = vmul.f32 %v529, %v543
        %v552 = vmul.f32 %v530, %v543
        %v553 = vmul.f32 %v531, %v543
        %v554 = vmul.f32 %v532, %v543
        %v555 = vmul.f32 %v533, %v543
        %v556 = vmul.f32 %v534, %v543
        %v557 = vmul.f32 %v535, %v543
        %v558 = vmul.f32 %v536, %v543
        %v559 = vmul.f32 %v537, %v543
        %v560 = vld [vmem:[#allocation2] sm:$0xff]
        %v561 = vld [vmem:[#allocation2 + $0x8] sm:$0xff]
        %v562 = vld [vmem:[#allocation2 + $0x10] sm:$0xff]
        %v563 = vld [vmem:[#allocation2 + $0x18] sm:$0xff]
        %v564 = vld [vmem:[#allocation2 + $0x20] sm:$0xff]
        %v565 = vld [vmem:[#allocation2 + $0x28] sm:$0xff]
        %v566 = vld [vmem:[#allocation2 + $0x30] sm:$0xff]
        %v567 = vld [vmem:[#allocation2 + $0x38] sm:$0xff]
        %v568 = vld [vmem:[#allocation2 + $0x40] sm:$0xff]
        %v569 = vld [vmem:[#allocation2 + $0x48] sm:$0xff]
        %v570 = vld [vmem:[#allocation2 + $0x50] sm:$0xff]
        %v571 = vld [vmem:[#allocation2 + $0x58] sm:$0xff]
        %v572 = vld [vmem:[#allocation2 + $0x60] sm:$0xff]
        %v573 = vld [vmem:[#allocation2 + $0x68] sm:$0xff]
        %v574 = vld [vmem:[#allocation2 + $0x70] sm:$0xff]
        %v575 = vld [vmem:[#allocation2 + $0x78] sm:$0xff]
        %v576 = vadd.f32 %v560, %v544
        %v577 = vadd.f32 %v561, %v545
        %v578 = vadd.f32 %v562, %v546
        %v579 = vadd.f32 %v563, %v547
        %v580 = vadd.f32 %v564, %v548
        %v581 = vadd.f32 %v565, %v549
        %v582 = vadd.f32 %v566, %v550
        %v583 = vadd.f32 %v567, %v551
        %v584 = vadd.f32 %v568, %v552
        %v585 = vadd.f32 %v569, %v553
        %v586 = vadd.f32 %v570, %v554
        %v587 = vadd.f32 %v571, %v555
        %v588 = vadd.f32 %v572, %v556
        %v589 = vadd.f32 %v573, %v557
        %v590 = vadd.f32 %v574, %v558
        %v591 = vadd.f32 %v575, %v559
        %592 = vst [vmem:[#allocation2] sm:$0xff] %v576
        %593 = vst [vmem:[#allocation2 + $0x8] sm:$0xff] %v577
        %594 = vst [vmem:[#allocation2 + $0x10] sm:$0xff] %v578
        %595 = vst [vmem:[#allocation2 + $0x18] sm:$0xff] %v579
        %596 = vst [vmem:[#allocation2 + $0x20] sm:$0xff] %v580
        %597 = vst [vmem:[#allocation2 + $0x28] sm:$0xff] %v581
        %598 = vst [vmem:[#allocation2 + $0x30] sm:$0xff] %v582
        %599 = vst [vmem:[#allocation2 + $0x38] sm:$0xff] %v583
        %600 = vst [vmem:[#allocation2 + $0x40] sm:$0xff] %v584
        %601 = vst [vmem:[#allocation2 + $0x48] sm:$0xff] %v585
        %602 = vst [vmem:[#allocation2 + $0x50] sm:$0xff] %v586
        %603 = vst [vmem:[#allocation2 + $0x58] sm:$0xff] %v587
        %604 = vst [vmem:[#allocation2 + $0x60] sm:$0xff] %v588
        %605 = vst [vmem:[#allocation2 + $0x68] sm:$0xff] %v589
        %606 = vst [vmem:[#allocation2 + $0x70] sm:$0xff] %v590
        %607 = vst [vmem:[#allocation2 + $0x78] sm:$0xff] %v591
        %v608 = vld [vmem:[%s521 + $0x1] sm:$0xff]
        %v609 = vld [vmem:[%s521 + $0x9] sm:$0xff]
        %v610 = vld [vmem:[%s521 + $0x19] sm:$0xff]
        %v611 = vld [vmem:[%s521 + $0x21] sm:$0xff]
        %v612 = vld [vmem:[%s521 + $0x31] sm:$0xff]
        %v613 = vld [vmem:[%s521 + $0x39] sm:$0xff]
        %v614 = vld [vmem:[%s521 + $0x49] sm:$0xff]
        %v615 = vld [vmem:[%s521 + $0x51] sm:$0xff]
        %v616 = vld [vmem:[%s521 + $0x61] sm:$0xff]
        %v617 = vld [vmem:[%s521 + $0x69] sm:$0xff]
        %v618 = vld [vmem:[%s521 + $0x79] sm:$0xff]
        %v619 = vld [vmem:[%s521 + $0x81] sm:$0xff]
        %v620 = vld [vmem:[%s521 + $0x91] sm:$0xff]
        %v621 = vld [vmem:[%s521 + $0x99] sm:$0xff]
        %v622 = vld [vmem:[%s521 + $0xa9] sm:$0xff]
        %v623 = vld [vmem:[%s521 + $0xb1] sm:$0xff]
        %v624 = vld [vmem:[%s538 + $0x1] sm:$0x1]
        %v625 = vlaneseq
        %v626 = vshrl.u32 %v625, 7
        %v627 = vsub.s32 0, %v626
        %v628 = vrot.slane %v624, %v627
        %v629 = vmul.f32 %v608, %v628
        %v630 = vmul.f32 %v609, %v628
        %v631 = vmul.f32 %v610, %v628
        %v632 = vmul.f32 %v611, %v628
        %v633 = vmul.f32 %v612, %v628
        %v634 = vmul.f32 %v613, %v628
        %v635 = vmul.f32 %v614, %v628
        %v636 = vmul.f32 %v615, %v628
        %v637 = vmul.f32 %v616, %v628
        %v638 = vmul.f32 %v617, %v628
        %v639 = vmul.f32 %v618, %v628
        %v640 = vmul.f32 %v619, %v628
        %v641 = vmul.f32 %v620, %v628
        %v642 = vmul.f32 %v621, %v628
        %v643 = vmul.f32 %v622, %v628
        %v644 = vmul.f32 %v623, %v628
        %v645 = vld [vmem:[#allocation2] sm:$0xff]
        %v646 = vld [vmem:[#allocation2 + $0x8] sm:$0xff]
        %v647 = vld [vmem:[#allocation2 + $0x10] sm:$0xff]
        %v648 = vld [vmem:[#allocation2 + $0x18] sm:$0xff]
        %v649 = vld [vmem:[#allocation2 + $0x20] sm:$0xff]
        %v650 = vld [vmem:[#allocation2 + $0x28] sm:$0xff]
        %v651 = vld [vmem:[#allocation2 + $0x30] sm:$0xff]
        %v652 = vld [vmem:[#allocation2 + $0x38] sm:$0xff]
        %v653 = vld [vmem:[#allocation2 + $0x40] sm:$0xff]
        %v654 = vld [vmem:[#allocation2 + $0x48] sm:$0xff]
        %v655 = vld [vmem:[#allocation2 + $0x50] sm:$0xff]
        %v656 = vld [vmem:[#allocation2 + $0x58] sm:$0xff]
        %v657 = vld [vmem:[#allocation2 + $0x60] sm:$0xff]
        %v658 = vld [vmem:[#allocation2 + $0x68] sm:$0xff]
        %v659 = vld [vmem:[#allocation2 + $0x70] sm:$0xff]
        %v660 = vld [vmem:[#allocation2 + $0x78] sm:$0xff]
        %v661 = vadd.f32 %v645, %v629
        %v662 = vadd.f32 %v646, %v630
        %v663 = vadd.f32 %v647, %v631
        %v664 = vadd.f32 %v648, %v632
        %v665 = vadd.f32 %v649, %v633
        %v666 = vadd.f32 %v650, %v634
        %v667 = vadd.f32 %v651, %v635
        %v668 = vadd.f32 %v652, %v636
        %v669 = vadd.f32 %v653, %v637
        %v670 = vadd.f32 %v654, %v638
        %v671 = vadd.f32 %v655, %v639
        %v672 = vadd.f32 %v656, %v640
        %v673 = vadd.f32 %v657, %v641
        %v674 = vadd.f32 %v658, %v642
        %v675 = vadd.f32 %v659, %v643
        %v676 = vadd.f32 %v660, %v644
        %677 = vst [vmem:[#allocation2] sm:$0xff] %v661
        %678 = vst [vmem:[#allocation2 + $0x8] sm:$0xff] %v662
        %679 = vst [vmem:[#allocation2 + $0x10] sm:$0xff] %v663
        %680 = vst [vmem:[#allocation2 + $0x18] sm:$0xff] %v664
        %681 = vst [vmem:[#allocation2 + $0x20] sm:$0xff] %v665
        %682 = vst [vmem:[#allocation2 + $0x28] sm:$0xff] %v666
        %683 = vst [vmem:[#allocation2 + $0x30] sm:$0xff] %v667
        %684 = vst [vmem:[#allocation2 + $0x38] sm:$0xff] %v668
        %685 = vst [vmem:[#allocation2 + $0x40] sm:$0xff] %v669
        %686 = vst [vmem:[#allocation2 + $0x48] sm:$0xff] %v670
        %687 = vst [vmem:[#allocation2 + $0x50] sm:$0xff] %v671
        %688 = vst [vmem:[#allocation2 + $0x58] sm:$0xff] %v672
        %689 = vst [vmem:[#allocation2 + $0x60] sm:$0xff] %v673
        %690 = vst [vmem:[#allocation2 + $0x68] sm:$0xff] %v674
        %691 = vst [vmem:[#allocation2 + $0x70] sm:$0xff] %v675
        %692 = vst [vmem:[#allocation2 + $0x78] sm:$0xff] %v676
        %v693 = vld [vmem:[%s521 + $0x2] sm:$0xff]
        %v694 = vld [vmem:[%s521 + $0xa] sm:$0xff]
        %v695 = vld [vmem:[%s521 + $0x1a] sm:$0xff]
        %v696 = vld [vmem:[%s521 + $0x22] sm:$0xff]
        %v697 = vld [vmem:[%s521 + $0x32] sm:$0xff]
        %v698 = vld [vmem:[%s521 + $0x3a] sm:$0xff]
        %v699 = vld [vmem:[%s521 + $0x4a] sm:$0xff]
        %v700 = vld [vmem:[%s521 + $0x52] sm:$0xff]
        %v701 = vld [vmem:[%s521 + $0x62] sm:$0xff]
        %v702 = vld [vmem:[%s521 + $0x6a] sm:$0xff]
        %v703 = vld [vmem:[%s521 + $0x7a] sm:$0xff]
        %v704 = vld [vmem:[%s521 + $0x82] sm:$0xff]
        %v705 = vld [vmem:[%s521 + $0x92] sm:$0xff]
        %v706 = vld [vmem:[%s521 + $0x9a] sm:$0xff]
        %v707 = vld [vmem:[%s521 + $0xaa] sm:$0xff]
        %v708 = vld [vmem:[%s521 + $0xb2] sm:$0xff]
        %v709 = vld [vmem:[%s538 + $0x2] sm:$0x1]
        %v710 = vlaneseq
        %v711 = vshrl.u32 %v710, 7
        %v712 = vsub.s32 0, %v711
        %v713 = vrot.slane %v709, %v712
        %v714 = vmul.f32 %v693, %v713
        %v715 = vmul.f32 %v694, %v713
        %v716 = vmul.f32 %v695, %v713
        %v717 = vmul.f32 %v696, %v713
        %v718 = vmul.f32 %v697, %v713
        %v719 = vmul.f32 %v698, %v713
        %v720 = vmul.f32 %v699, %v713
        %v721 = vmul.f32 %v700, %v713
        %v722 = vmul.f32 %v701, %v713
        %v723 = vmul.f32 %v702, %v713
        %v724 = vmul.f32 %v703, %v713
        %v725 = vmul.f32 %v704, %v713
        %v726 = vmul.f32 %v705, %v713
        %v727 = vmul.f32 %v706, %v713
        %v728 = vmul.f32 %v707, %v713
        %v729 = vmul.f32 %v708, %v713
        %v730 = vld [vmem:[#allocation2] sm:$0xff]
        %v731 = vld [vmem:[#allocation2 + $0x8] sm:$0xff]
        %v732 = vld [vmem:[#allocation2 + $0x10] sm:$0xff]
        %v733 = vld [vmem:[#allocation2 + $0x18] sm:$0xff]
        %v734 = vld [vmem:[#allocation2 + $0x20] sm:$0xff]
        %v735 = vld [vmem:[#allocation2 + $0x28] sm:$0xff]
        %v736 = vld [vmem:[#allocation2 + $0x30] sm:$0xff]
        %v737 = vld [vmem:[#allocation2 + $0x38] sm:$0xff]
        %v738 = vld [vmem:[#allocation2 + $0x40] sm:$0xff]
        %v739 = vld [vmem:[#allocation2 + $0x48] sm:$0xff]
        %v740 = vld [vmem:[#allocation2 + $0x50] sm:$0xff]
        %v741 = vld [vmem:[#allocation2 + $0x58] sm:$0xff]
        %v742 = vld [vmem:[#allocation2 + $0x60] sm:$0xff]
        %v743 = vld [vmem:[#allocation2 + $0x68] sm:$0xff]
        %v744 = vld [vmem:[#allocation2 + $0x70] sm:$0xff]
        %v745 = vld [vmem:[#allocation2 + $0x78] sm:$0xff]
        %v746 = vadd.f32 %v730, %v714
        %v747 = vadd.f32 %v731, %v715
        %v748 = vadd.f32 %v732, %v716
        %v749 = vadd.f32 %v733, %v717
        %v750 = vadd.f32 %v734, %v718
        %v751 = vadd.f32 %v735, %v719
        %v752 = vadd.f32 %v736, %v720
        %v753 = vadd.f32 %v737, %v721
        %v754 = vadd.f32 %v738, %v722
        %v755 = vadd.f32 %v739, %v723
        %v756 = vadd.f32 %v740, %v724
        %v757 = vadd.f32 %v741, %v725
        %v758 = vadd.f32 %v742, %v726
        %v759 = vadd.f32 %v743, %v727
        %v760 = vadd.f32 %v744, %v728
        %v761 = vadd.f32 %v745, %v729
        %762 = vst [vmem:[#allocation2] sm:$0xff] %v746
        %763 = vst [vmem:[#allocation2 + $0x8] sm:$0xff] %v747
        %764 = vst [vmem:[#allocation2 + $0x10] sm:$0xff] %v748
        %765 = vst [vmem:[#allocation2 + $0x18] sm:$0xff] %v749
        %766 = vst [vmem:[#allocation2 + $0x20] sm:$0xff] %v750
        %767 = vst [vmem:[#allocation2 + $0x28] sm:$0xff] %v751
        %768 = vst [vmem:[#allocation2 + $0x30] sm:$0xff] %v752
        %769 = vst [vmem:[#allocation2 + $0x38] sm:$0xff] %v753
        %770 = vst [vmem:[#allocation2 + $0x40] sm:$0xff] %v754
        %771 = vst [vmem:[#allocation2 + $0x48] sm:$0xff] %v755
        %772 = vst [vmem:[#allocation2 + $0x50] sm:$0xff] %v756
        %773 = vst [vmem:[#allocation2 + $0x58] sm:$0xff] %v757
        %774 = vst [vmem:[#allocation2 + $0x60] sm:$0xff] %v758
        %775 = vst [vmem:[#allocation2 + $0x68] sm:$0xff] %v759
        %776 = vst [vmem:[#allocation2 + $0x70] sm:$0xff] %v760
        %777 = vst [vmem:[#allocation2 + $0x78] sm:$0xff] %v761
        %s778 = sadd.s32 %s293, 2
        %s779 = smul.u32 %s778, 24
        %s780 = scalar_lea.vmem %s290, %s779
        %v781 = vld [vmem:[%s780] sm:$0xff]
        %v782 = vld [vmem:[%s780 + $0x8] sm:$0xff]
        %v783 = vld [vmem:[%s780 + $0x18] sm:$0xff]
        %v784 = vld [vmem:[%s780 + $0x20] sm:$0xff]
        %v785 = vld [vmem:[%s780 + $0x30] sm:$0xff]
        %v786 = vld [vmem:[%s780 + $0x38] sm:$0xff]
        %v787 = vld [vmem:[%s780 + $0x48] sm:$0xff]
        %v788 = vld [vmem:[%s780 + $0x50] sm:$0xff]
        %v789 = vld [vmem:[%s780 + $0x60] sm:$0xff]
        %v790 = vld [vmem:[%s780 + $0x68] sm:$0xff]
        %v791 = vld [vmem:[%s780 + $0x78] sm:$0xff]
        %v792 = vld [vmem:[%s780 + $0x80] sm:$0xff]
        %v793 = vld [vmem:[%s780 + $0x90] sm:$0xff]
        %v794 = vld [vmem:[%s780 + $0x98] sm:$0xff]
        %v795 = vld [vmem:[%s780 + $0xa8] sm:$0xff]
        %v796 = vld [vmem:[%s780 + $0xb0] sm:$0xff]
        %s797 = scalar_lea.vmem %s1, 8
        %v798 = vld [vmem:[%s797] sm:$0x1]
        %v799 = vlaneseq
        %v800 = vshrl.u32 %v799, 7
        %v801 = vsub.s32 0, %v800
        %v802 = vrot.slane %v798, %v801
        %v803 = vmul.f32 %v781, %v802
        %v804 = vmul.f32 %v782, %v802
        %v805 = vmul.f32 %v783, %v802
        %v806 = vmul.f32 %v784, %v802
        %v807 = vmul.f32 %v785, %v802
        %v808 = vmul.f32 %v786, %v802
        %v809 = vmul.f32 %v787, %v802
        %v810 = vmul.f32 %v788, %v802
        %v811 = vmul.f32 %v789, %v802
        %v812 = vmul.f32 %v790, %v802
        %v813 = vmul.f32 %v791, %v802
        %v814 = vmul.f32 %v792, %v802
        %v815 = vmul.f32 %v793, %v802
        %v816 = vmul.f32 %v794, %v802
        %v817 = vmul.f32 %v795, %v802
        %v818 = vmul.f32 %v796, %v802
        %v819 = vld [vmem:[#allocation2] sm:$0xff]
        %v820 = vld [vmem:[#allocation2 + $0x8] sm:$0xff]
        %v821 = vld [vmem:[#allocation2 + $0x10] sm:$0xff]
        %v822 = vld [vmem:[#allocation2 + $0x18] sm:$0xff]
        %v823 = vld [vmem:[#allocation2 + $0x20] sm:$0xff]
        %v824 = vld [vmem:[#allocation2 + $0x28] sm:$0xff]
        %v825 = vld [vmem:[#allocation2 + $0x30] sm:$0xff]
        %v826 = vld [vmem:[#allocation2 + $0x38] sm:$0xff]
        %v827 = vld [vmem:[#allocation2 + $0x40] sm:$0xff]
        %v828 = vld [vmem:[#allocation2 + $0x48] sm:$0xff]
        %v829 = vld [vmem:[#allocation2 + $0x50] sm:$0xff]
        %v830 = vld [vmem:[#allocation2 + $0x58] sm:$0xff]
        %v831 = vld [vmem:[#allocation2 + $0x60] sm:$0xff]
        %v832 = vld [vmem:[#allocation2 + $0x68] sm:$0xff]
        %v833 = vld [vmem:[#allocation2 + $0x70] sm:$0xff]
        %v834 = vld [vmem:[#allocation2 + $0x78] sm:$0xff]
        %v835 = vadd.f32 %v819, %v803
        %v836 = vadd.f32 %v820, %v804
        %v837 = vadd.f32 %v821, %v805
        %v838 = vadd.f32 %v822, %v806
        %v839 = vadd.f32 %v823, %v807
        %v840 = vadd.f32 %v824, %v808
        %v841 = vadd.f32 %v825, %v809
        %v842 = vadd.f32 %v826, %v810
        %v843 = vadd.f32 %v827, %v811
        %v844 = vadd.f32 %v828, %v812
        %v845 = vadd.f32 %v829, %v813
        %v846 = vadd.f32 %v830, %v814
        %v847 = vadd.f32 %v831, %v815
        %v848 = vadd.f32 %v832, %v816
        %v849 = vadd.f32 %v833, %v817
        %v850 = vadd.f32 %v834, %v818
        %851 = vst [vmem:[#allocation2] sm:$0xff] %v835
        %852 = vst [vmem:[#allocation2 + $0x8] sm:$0xff] %v836
        %853 = vst [vmem:[#allocation2 + $0x10] sm:$0xff] %v837
        %854 = vst [vmem:[#allocation2 + $0x18] sm:$0xff] %v838
        %855 = vst [vmem:[#allocation2 + $0x20] sm:$0xff] %v839
        %856 = vst [vmem:[#allocation2 + $0x28] sm:$0xff] %v840
        %857 = vst [vmem:[#allocation2 + $0x30] sm:$0xff] %v841
        %858 = vst [vmem:[#allocation2 + $0x38] sm:$0xff] %v842
        %859 = vst [vmem:[#allocation2 + $0x40] sm:$0xff] %v843
        %860 = vst [vmem:[#allocation2 + $0x48] sm:$0xff] %v844
        %861 = vst [vmem:[#allocation2 + $0x50] sm:$0xff] %v845
        %862 = vst [vmem:[#allocation2 + $0x58] sm:$0xff] %v846
        %863 = vst [vmem:[#allocation2 + $0x60] sm:$0xff] %v847
        %864 = vst [vmem:[#allocation2 + $0x68] sm:$0xff] %v848
        %865 = vst [vmem:[#allocation2 + $0x70] sm:$0xff] %v849
        %866 = vst [vmem:[#allocation2 + $0x78] sm:$0xff] %v850
        %v867 = vld [vmem:[%s780 + $0x1] sm:$0xff]
        %v868 = vld [vmem:[%s780 + $0x9] sm:$0xff]
        %v869 = vld [vmem:[%s780 + $0x19] sm:$0xff]
        %v870 = vld [vmem:[%s780 + $0x21] sm:$0xff]
        %v871 = vld [vmem:[%s780 + $0x31] sm:$0xff]
        %v872 = vld [vmem:[%s780 + $0x39] sm:$0xff]
        %v873 = vld [vmem:[%s780 + $0x49] sm:$0xff]
        %v874 = vld [vmem:[%s780 + $0x51] sm:$0xff]
        %v875 = vld [vmem:[%s780 + $0x61] sm:$0xff]
        %v876 = vld [vmem:[%s780 + $0x69] sm:$0xff]
        %v877 = vld [vmem:[%s780 + $0x79] sm:$0xff]
        %v878 = vld [vmem:[%s780 + $0x81] sm:$0xff]
        %v879 = vld [vmem:[%s780 + $0x91] sm:$0xff]
        %v880 = vld [vmem:[%s780 + $0x99] sm:$0xff]
        %v881 = vld [vmem:[%s780 + $0xa9] sm:$0xff]
        %v882 = vld [vmem:[%s780 + $0xb1] sm:$0xff]
        %v883 = vld [vmem:[%s797 + $0x1] sm:$0x1]
        %v884 = vlaneseq
        %v885 = vshrl.u32 %v884, 7
        %v886 = vsub.s32 0, %v885
        %v887 = vrot.slane %v883, %v886
        %v888 = vmul.f32 %v867, %v887
        %v889 = vmul.f32 %v868, %v887
        %v890 = vmul.f32 %v869, %v887
        %v891 = vmul.f32 %v870, %v887
        %v892 = vmul.f32 %v871, %v887
        %v893 = vmul.f32 %v872, %v887
        %v894 = vmul.f32 %v873, %v887
        %v895 = vmul.f32 %v874, %v887
        %v896 = vmul.f32 %v875, %v887
        %v897 = vmul.f32 %v876, %v887
        %v898 = vmul.f32 %v877, %v887
        %v899 = vmul.f32 %v878, %v887
        %v900 = vmul.f32 %v879, %v887
        %v901 = vmul.f32 %v880, %v887
        %v902 = vmul.f32 %v881, %v887
        %v903 = vmul.f32 %v882, %v887
        %v904 = vld [vmem:[#allocation2] sm:$0xff]
        %v905 = vld [vmem:[#allocation2 + $0x8] sm:$0xff]
        %v906 = vld [vmem:[#allocation2 + $0x10] sm:$0xff]
        %v907 = vld [vmem:[#allocation2 + $0x18] sm:$0xff]
        %v908 = vld [vmem:[#allocation2 + $0x20] sm:$0xff]
        %v909 = vld [vmem:[#allocation2 + $0x28] sm:$0xff]
        %v910 = vld [vmem:[#allocation2 + $0x30] sm:$0xff]
        %v911 = vld [vmem:[#allocation2 + $0x38] sm:$0xff]
        %v912 = vld [vmem:[#allocation2 + $0x40] sm:$0xff]
        %v913 = vld [vmem:[#allocation2 + $0x48] sm:$0xff]
        %v914 = vld [vmem:[#allocation2 + $0x50] sm:$0xff]
        %v915 = vld [vmem:[#allocation2 + $0x58] sm:$0xff]
        %v916 = vld [vmem:[#allocation2 + $0x60] sm:$0xff]
        %v917 = vld [vmem:[#allocation2 + $0x68] sm:$0xff]
        %v918 = vld [vmem:[#allocation2 + $0x70] sm:$0xff]
        %v919 = vld [vmem:[#allocation2 + $0x78] sm:$0xff]
        %v920 = vadd.f32 %v904, %v888
        %v921 = vadd.f32 %v905, %v889
        %v922 = vadd.f32 %v906, %v890
        %v923 = vadd.f32 %v907, %v891
        %v924 = vadd.f32 %v908, %v892
        %v925 = vadd.f32 %v909, %v893
        %v926 = vadd.f32 %v910, %v894
        %v927 = vadd.f32 %v911, %v895
        %v928 = vadd.f32 %v912, %v896
        %v929 = vadd.f32 %v913, %v897
        %v930 = vadd.f32 %v914, %v898
        %v931 = vadd.f32 %v915, %v899
        %v932 = vadd.f32 %v916, %v900
        %v933 = vadd.f32 %v917, %v901
        %v934 = vadd.f32 %v918, %v902
        %v935 = vadd.f32 %v919, %v903
        %936 = vst [vmem:[#allocation2] sm:$0xff] %v920
        %937 = vst [vmem:[#allocation2 + $0x8] sm:$0xff] %v921
        %938 = vst [vmem:[#allocation2 + $0x10] sm:$0xff] %v922
        %939 = vst [vmem:[#allocation2 + $0x18] sm:$0xff] %v923
        %940 = vst [vmem:[#allocation2 + $0x20] sm:$0xff] %v924
        %941 = vst [vmem:[#allocation2 + $0x28] sm:$0xff] %v925
        %942 = vst [vmem:[#allocation2 + $0x30] sm:$0xff] %v926
        %943 = vst [vmem:[#allocation2 + $0x38] sm:$0xff] %v927
        %944 = vst [vmem:[#allocation2 + $0x40] sm:$0xff] %v928
        %945 = vst [vmem:[#allocation2 + $0x48] sm:$0xff] %v929
        %946 = vst [vmem:[#allocation2 + $0x50] sm:$0xff] %v930
        %947 = vst [vmem:[#allocation2 + $0x58] sm:$0xff] %v931
        %948 = vst [vmem:[#allocation2 + $0x60] sm:$0xff] %v932
        %949 = vst [vmem:[#allocation2 + $0x68] sm:$0xff] %v933
        %950 = vst [vmem:[#allocation2 + $0x70] sm:$0xff] %v934
        %951 = vst [vmem:[#allocation2 + $0x78] sm:$0xff] %v935
        %v952 = vld [vmem:[%s780 + $0x2] sm:$0xff]
        %v953 = vld [vmem:[%s780 + $0xa] sm:$0xff]
        %v954 = vld [vmem:[%s780 + $0x1a] sm:$0xff]
        %v955 = vld [vmem:[%s780 + $0x22] sm:$0xff]
        %v956 = vld [vmem:[%s780 + $0x32] sm:$0xff]
        %v957 = vld [vmem:[%s780 + $0x3a] sm:$0xff]
        %v958 = vld [vmem:[%s780 + $0x4a] sm:$0xff]
        %v959 = vld [vmem:[%s780 + $0x52] sm:$0xff]
        %v960 = vld [vmem:[%s780 + $0x62] sm:$0xff]
        %v961 = vld [vmem:[%s780 + $0x6a] sm:$0xff]
        %v962 = vld [vmem:[%s780 + $0x7a] sm:$0xff]
        %v963 = vld [vmem:[%s780 + $0x82] sm:$0xff]
        %v964 = vld [vmem:[%s780 + $0x92] sm:$0xff]
        %v965 = vld [vmem:[%s780 + $0x9a] sm:$0xff]
        %v966 = vld [vmem:[%s780 + $0xaa] sm:$0xff]
        %v967 = vld [vmem:[%s780 + $0xb2] sm:$0xff]
        %v968 = vld [vmem:[%s797 + $0x2] sm:$0x1]
        %v969 = vlaneseq
        %v970 = vshrl.u32 %v969, 7
        %v971 = vsub.s32 0, %v970
        %v972 = vrot.slane %v968, %v971
        %v973 = vmul.f32 %v952, %v972
        %v974 = vmul.f32 %v953, %v972
        %v975 = vmul.f32 %v954, %v972
        %v976 = vmul.f32 %v955, %v972
        %v977 = vmul.f32 %v956, %v972
        %v978 = vmul.f32 %v957, %v972
        %v979 = vmul.f32 %v958, %v972
        %v980 = vmul.f32 %v959, %v972
        %v981 = vmul.f32 %v960, %v972
        %v982 = vmul.f32 %v961, %v972
        %v983 = vmul.f32 %v962, %v972
        %v984 = vmul.f32 %v963, %v972
        %v985 = vmul.f32 %v964, %v972
        %v986 = vmul.f32 %v965, %v972
        %v987 = vmul.f32 %v966, %v972
        %v988 = vmul.f32 %v967, %v972
        %v989 = vld [vmem:[#allocation2] sm:$0xff]
        %v990 = vld [vmem:[#allocation2 + $0x8] sm:$0xff]
        %v991 = vld [vmem:[#allocation2 + $0x10] sm:$0xff]
        %v992 = vld [vmem:[#allocation2 + $0x18] sm:$0xff]
        %v993 = vld [vmem:[#allocation2 + $0x20] sm:$0xff]
        %v994 = vld [vmem:[#allocation2 + $0x28] sm:$0xff]
        %v995 = vld [vmem:[#allocation2 + $0x30] sm:$0xff]
        %v996 = vld [vmem:[#allocation2 + $0x38] sm:$0xff]
        %v997 = vld [vmem:[#allocation2 + $0x40] sm:$0xff]
        %v998 = vld [vmem:[#allocation2 + $0x48] sm:$0xff]
        %v999 = vld [vmem:[#allocation2 + $0x50] sm:$0xff]
        %v1000 = vld [vmem:[#allocation2 + $0x58] sm:$0xff]
        %v1001 = vld [vmem:[#allocation2 + $0x60] sm:$0xff]
        %v1002 = vld [vmem:[#allocation2 + $0x68] sm:$0xff]
        %v1003 = vld [vmem:[#allocation2 + $0x70] sm:$0xff]
        %v1004 = vld [vmem:[#allocation2 + $0x78] sm:$0xff]
        %v1005 = vadd.f32 %v989, %v973
        %v1006 = vadd.f32 %v990, %v974
        %v1007 = vadd.f32 %v991, %v975
        %v1008 = vadd.f32 %v992, %v976
        %v1009 = vadd.f32 %v993, %v977
        %v1010 = vadd.f32 %v994, %v978
        %v1011 = vadd.f32 %v995, %v979
        %v1012 = vadd.f32 %v996, %v980
        %v1013 = vadd.f32 %v997, %v981
        %v1014 = vadd.f32 %v998, %v982
        %v1015 = vadd.f32 %v999, %v983
        %v1016 = vadd.f32 %v1000, %v984
        %v1017 = vadd.f32 %v1001, %v985
        %v1018 = vadd.f32 %v1002, %v986
        %v1019 = vadd.f32 %v1003, %v987
        %v1020 = vadd.f32 %v1004, %v988
        %1021 = vst [vmem:[#allocation2] sm:$0xff] %v1005
        %1022 = vst [vmem:[#allocation2 + $0x8] sm:$0xff] %v1006
        %1023 = vst [vmem:[#allocation2 + $0x10] sm:$0xff] %v1007
        %1024 = vst [vmem:[#allocation2 + $0x18] sm:$0xff] %v1008
        %1025 = vst [vmem:[#allocation2 + $0x20] sm:$0xff] %v1009
        %1026 = vst [vmem:[#allocation2 + $0x28] sm:$0xff] %v1010
        %1027 = vst [vmem:[#allocation2 + $0x30] sm:$0xff] %v1011
        %1028 = vst [vmem:[#allocation2 + $0x38] sm:$0xff] %v1012
        %1029 = vst [vmem:[#allocation2 + $0x40] sm:$0xff] %v1013
        %1030 = vst [vmem:[#allocation2 + $0x48] sm:$0xff] %v1014
        %1031 = vst [vmem:[#allocation2 + $0x50] sm:$0xff] %v1015
        %1032 = vst [vmem:[#allocation2 + $0x58] sm:$0xff] %v1016
        %1033 = vst [vmem:[#allocation2 + $0x60] sm:$0xff] %v1017
        %1034 = vst [vmem:[#allocation2 + $0x68] sm:$0xff] %v1018
        %1035 = vst [vmem:[#allocation2 + $0x70] sm:$0xff] %v1019
        %1036 = vst [vmem:[#allocation2 + $0x78] sm:$0xff] %v1020
        %v1037 = vld [vmem:[#allocation2] sm:$0xff]
        %v1038 = vld [vmem:[#allocation2 + $0x8] sm:$0xff]
        %v1039 = vld [vmem:[#allocation2 + $0x10] sm:$0xff]
        %v1040 = vld [vmem:[#allocation2 + $0x18] sm:$0xff]
        %v1041 = vld [vmem:[#allocation2 + $0x20] sm:$0xff]
        %v1042 = vld [vmem:[#allocation2 + $0x28] sm:$0xff]
        %v1043 = vld [vmem:[#allocation2 + $0x30] sm:$0xff]
        %v1044 = vld [vmem:[#allocation2 + $0x38] sm:$0xff]
        %v1045 = vld [vmem:[#allocation2 + $0x40] sm:$0xff]
        %v1046 = vld [vmem:[#allocation2 + $0x48] sm:$0xff]
        %v1047 = vld [vmem:[#allocation2 + $0x50] sm:$0xff]
        %v1048 = vld [vmem:[#allocation2 + $0x58] sm:$0xff]
        %v1049 = vld [vmem:[#allocation2 + $0x60] sm:$0xff]
        %v1050 = vld [vmem:[#allocation2 + $0x68] sm:$0xff]
        %v1051 = vld [vmem:[#allocation2 + $0x70] sm:$0xff]
        %v1052 = vld [vmem:[#allocation2 + $0x78] sm:$0xff]
        %v1053 = vld [vmem:[%s2] sm:$0x1]
        %v1055 = vlaneseq
        %v1056 = vshrl.u32 %v1055, 7
        %v1057 = vsub.s32 0, %v1056
        %v1058 = vrot.slane %v1053, %v1057
        %v1060 = vmul.f32 %v1037, %v1058
        %v1061 = vmul.f32 %v1038, %v1058
        %v1062 = vmul.f32 %v1039, %v1058
        %v1063 = vmul.f32 %v1040, %v1058
        %v1064 = vmul.f32 %v1041, %v1058
        %v1065 = vmul.f32 %v1042, %v1058
        %v1066 = vmul.f32 %v1043, %v1058
        %v1067 = vmul.f32 %v1044, %v1058
        %v1068 = vmul.f32 %v1045, %v1058
        %v1069 = vmul.f32 %v1046, %v1058
        %v1070 = vmul.f32 %v1047, %v1058
        %v1071 = vmul.f32 %v1048, %v1058
        %v1072 = vmul.f32 %v1049, %v1058
        %v1073 = vmul.f32 %v1050, %v1058
        %v1074 = vmul.f32 %v1051, %v1058
        %v1075 = vmul.f32 %v1052, %v1058
        %v1076 = vld [vmem:[%s3] sm:$0x1]
        %v1078 = vlaneseq
        %v1079 = vshrl.u32 %v1078, 7
        %v1080 = vsub.s32 0, %v1079
        %v1081 = vrot.slane %v1076, %v1080
        %v1083 = vadd.f32 %v1060, %v1081
        %v1084 = vadd.f32 %v1061, %v1081
        %v1085 = vadd.f32 %v1062, %v1081
        %v1086 = vadd.f32 %v1063, %v1081
        %v1087 = vadd.f32 %v1064, %v1081
        %v1088 = vadd.f32 %v1065, %v1081
        %v1089 = vadd.f32 %v1066, %v1081
        %v1090 = vadd.f32 %v1067, %v1081
        %v1091 = vadd.f32 %v1068, %v1081
        %v1092 = vadd.f32 %v1069, %v1081
        %v1093 = vadd.f32 %v1070, %v1081
        %v1094 = vadd.f32 %v1071, %v1081
        %v1095 = vadd.f32 %v1072, %v1081
        %v1096 = vadd.f32 %v1073, %v1081
        %v1097 = vadd.f32 %v1074, %v1081
        %v1098 = vadd.f32 %v1075, %v1081
        %v1099 = vmax.f32 %v1083, 0.0
        %v1100 = vmax.f32 %v1084, 0.0
        %v1101 = vmax.f32 %v1085, 0.0
        %v1102 = vmax.f32 %v1086, 0.0
        %v1103 = vmax.f32 %v1087, 0.0
        %v1104 = vmax.f32 %v1088, 0.0
        %v1105 = vmax.f32 %v1089, 0.0
        %v1106 = vmax.f32 %v1090, 0.0
        %v1107 = vmax.f32 %v1091, 0.0
        %v1108 = vmax.f32 %v1092, 0.0
        %v1109 = vmax.f32 %v1093, 0.0
        %v1110 = vmax.f32 %v1094, 0.0
        %v1111 = vmax.f32 %v1095, 0.0
        %v1112 = vmax.f32 %v1096, 0.0
        %v1113 = vmax.f32 %v1097, 0.0
        %v1114 = vmax.f32 %v1098, 0.0
        %v1115 = vpack.c.bf16 %v1100, %v1099
        %v1116 = vpack.c.bf16 %v1102, %v1101
        %v1117 = vpack.c.bf16 %v1104, %v1103
        %v1118 = vpack.c.bf16 %v1106, %v1105
        %v1119 = vpack.c.bf16 %v1108, %v1107
        %v1120 = vpack.c.bf16 %v1110, %v1109
        %v1121 = vpack.c.bf16 %v1112, %v1111
        %v1122 = vpack.c.bf16 %v1114, %v1113
        %v1123 = vld [vmem:[%s4] sm:$0xf]
        %v1124 = vld [vmem:[%s4 + $0x4] sm:$0xf]
        %v1125 = vld [vmem:[%s4 + $0x8] sm:$0xf]
        %v1126 = vld [vmem:[%s4 + $0xc] sm:$0xf]
        %v1127 = vld [vmem:[%s4 + $0x10] sm:$0xf]
        %v1128 = vld [vmem:[%s4 + $0x14] sm:$0xf]
        %v1129 = vld [vmem:[%s4 + $0x18] sm:$0xf]
        %v1130 = vld [vmem:[%s4 + $0x1c] sm:$0xf]
        %v1131 = vld [vmem:[%s4 + $0x20] sm:$0xf]
        %v1132 = vld [vmem:[%s4 + $0x24] sm:$0xf]
        %v1133 = vld [vmem:[%s4 + $0x28] sm:$0xf]
        %v1134 = vld [vmem:[%s4 + $0x2c] sm:$0xf]
        %v1135 = vld [vmem:[%s4 + $0x30] sm:$0xf]
        %v1136 = vld [vmem:[%s4 + $0x34] sm:$0xf]
        %v1137 = vld [vmem:[%s4 + $0x38] sm:$0xf]
        %v1138 = vld [vmem:[%s4 + $0x3c] sm:$0xf]
        %v1155 = vunpack.c.l.b16 %v1123
        %v1156 = vunpack.c.l.b16 %v1124
        %v1157 = vunpack.c.l.b16 %v1125
        %v1158 = vunpack.c.l.b16 %v1126
        %v1159 = vunpack.c.l.b16 %v1127
        %v1160 = vunpack.c.l.b16 %v1128
        %v1161 = vunpack.c.l.b16 %v1129
        %v1162 = vunpack.c.l.b16 %v1130
        %v1163 = vunpack.c.l.b16 %v1131
        %v1164 = vunpack.c.l.b16 %v1132
        %v1165 = vunpack.c.l.b16 %v1133
        %v1166 = vunpack.c.l.b16 %v1134
        %v1167 = vunpack.c.l.b16 %v1135
        %v1168 = vunpack.c.l.b16 %v1136
        %v1169 = vunpack.c.l.b16 %v1137
        %v1170 = vunpack.c.l.b16 %v1138
        %v1171 = vpack.c.b16 %v1156, %v1155
        %v1172 = vpack.c.b16 %v1158, %v1157
        %v1173 = vpack.c.b16 %v1160, %v1159
        %v1174 = vpack.c.b16 %v1162, %v1161
        %v1175 = vpack.c.b16 %v1164, %v1163
        %v1176 = vpack.c.b16 %v1166, %v1165
        %v1177 = vpack.c.b16 %v1168, %v1167
        %v1178 = vpack.c.b16 %v1170, %v1169
        %1187 = vmatprep.subr.bf16.mxu0 0
        %1188 = vmatpush1.bf16.msra.mxu0 %v1171
        %1189 = vmatprep.subr.bf16.mxu0 0
        %1190 = vmatpush1.bf16.msra.mxu0 %v1172
        %1191 = vmatprep.subr.bf16.mxu0 0
        %1192 = vmatpush1.bf16.msra.mxu0 %v1173
        %1193 = vmatprep.subr.bf16.mxu0 0
        %1194 = vmatpush1.bf16.msra.mxu0 %v1174
        %1195 = vmatprep.subr.bf16.mxu0 0
        %1196 = vmatpush1.bf16.msra.mxu0 %v1175
        %1197 = vmatprep.subr.bf16.mxu0 0
        %1198 = vmatpush1.bf16.msra.mxu0 %v1176
        %1199 = vmatprep.subr.bf16.mxu0 0
        %1200 = vmatpush1.bf16.msra.mxu0 %v1177
        %1201 = vmatprep.subr.bf16.mxu0 0
        %1202 = vmatpush1.bf16.msra.mxu0 %v1178
        %1203 = vmatprep.subr.bf16.mxu0 0
        %1204 = vmatpush1.bf16.msra.mxu0 0
        %1205 = vmatprep.subr.bf16.mxu0 0
        %1206 = vmatpush1.bf16.msra.mxu0 0
        %1207 = vmatprep.subr.bf16.mxu0 0
        %1208 = vmatpush1.bf16.msra.mxu0 0
        %1209 = vmatprep.subr.bf16.mxu0 0
        %1210 = vmatpush1.bf16.msra.mxu0 0
        %1211 = vmatprep.subr.bf16.mxu0 0
        %1212 = vmatpush1.bf16.msra.mxu0 0
        %1213 = vmatprep.subr.bf16.mxu0 0
        %1214 = vmatpush1.bf16.msra.mxu0 0
        %1215 = vmatprep.subr.bf16.mxu0 0
        %1216 = vmatpush1.bf16.msra.mxu0 0
        %1217 = vmatprep.subr.bf16.mxu0 0
        %1218 = vmatpush1.bf16.msra.mxu0 0
        %1219 = vmatprep.mubr.bf16.mxu0 0
        %1220 = vmatmul.mubr.bf16.gmra.mrb[0].mxu0 %v1115
        %v1221 = vpop.f32.mrb[0].mxu0
        %v1222 = vadd.f32 0.0, %v1221
        %v1223 = vpop.f32.mrb[0].mxu0
        %v1224 = vpop.f32.mrb[0].mxu0
        %v1225 = vadd.f32 0.0, %v1224
        %v1226 = vpop.f32.mrb[0].mxu0
        %1227 = vmatprep.mubr.bf16.mxu0 0
        %1228 = vmatmul.mubr.bf16.gmra.mrb[0].mxu0 %v1116
        %v1229 = vpop.f32.mrb[0].mxu0
        %v1230 = vadd.f32 0.0, %v1229
        %v1231 = vpop.f32.mrb[0].mxu0
        %v1232 = vpop.f32.mrb[0].mxu0
        %v1233 = vadd.f32 0.0, %v1232
        %v1234 = vpop.f32.mrb[0].mxu0
        %1235 = vmatprep.mubr.bf16.mxu0 0
        %1236 = vmatmul.mubr.bf16.gmra.mrb[0].mxu0 %v1117
        %v1237 = vpop.f32.mrb[0].mxu0
        %v1238 = vadd.f32 0.0, %v1237
        %v1239 = vpop.f32.mrb[0].mxu0
        %v1240 = vpop.f32.mrb[0].mxu0
        %v1241 = vadd.f32 0.0, %v1240
        %v1242 = vpop.f32.mrb[0].mxu0
        %1243 = vmatprep.mubr.bf16.mxu0 0
        %1244 = vmatmul.mubr.bf16.gmra.mrb[0].mxu0 %v1118
        %v1245 = vpop.f32.mrb[0].mxu0
        %v1246 = vadd.f32 0.0, %v1245
        %v1247 = vpop.f32.mrb[0].mxu0
        %v1248 = vpop.f32.mrb[0].mxu0
        %v1249 = vadd.f32 0.0, %v1248
        %v1250 = vpop.f32.mrb[0].mxu0
        %1251 = vmatprep.mubr.bf16.mxu0 0
        %1252 = vmatmul.mubr.bf16.gmra.mrb[0].mxu0 %v1119
        %v1253 = vpop.f32.mrb[0].mxu0
        %v1254 = vadd.f32 0.0, %v1253
        %v1255 = vpop.f32.mrb[0].mxu0
        %v1256 = vpop.f32.mrb[0].mxu0
        %v1257 = vadd.f32 0.0, %v1256
        %v1258 = vpop.f32.mrb[0].mxu0
        %1259 = vmatprep.mubr.bf16.mxu0 0
        %1260 = vmatmul.mubr.bf16.gmra.mrb[0].mxu0 %v1120
        %v1261 = vpop.f32.mrb[0].mxu0
        %v1262 = vadd.f32 0.0, %v1261
        %v1263 = vpop.f32.mrb[0].mxu0
        %v1264 = vpop.f32.mrb[0].mxu0
        %v1265 = vadd.f32 0.0, %v1264
        %v1266 = vpop.f32.mrb[0].mxu0
        %1267 = vmatprep.mubr.bf16.mxu0 0
        %1268 = vmatmul.mubr.bf16.gmra.mrb[0].mxu0 %v1121
        %v1269 = vpop.f32.mrb[0].mxu0
        %v1270 = vadd.f32 0.0, %v1269
        %v1271 = vpop.f32.mrb[0].mxu0
        %v1272 = vpop.f32.mrb[0].mxu0
        %v1273 = vadd.f32 0.0, %v1272
        %v1274 = vpop.f32.mrb[0].mxu0
        %1275 = vmatprep.mubr.bf16.mxu0 0
        %1276 = vmatmul.mubr.bf16.gmra.mrb[0].mxu0 %v1122
        %v1277 = vpop.f32.mrb[0].mxu0
        %v1278 = vadd.f32 0.0, %v1277
        %v1279 = vpop.f32.mrb[0].mxu0
        %v1280 = vpop.f32.mrb[0].mxu0
        %v1281 = vadd.f32 0.0, %v1280
        %v1282 = vpop.f32.mrb[0].mxu0
        %1283 = vdwg.mxu0
        %v1284 = vld [vmem:[%s5] sm:$0x1]
        %v1286 = vlaneseq
        %v1287 = vshrl.u32 %v1286, 7
        %v1288 = vsub.s32 0, %v1287
        %v1289 = vrot.slane %v1284, %v1288
        %v1291 = vmul.f32 %v1222, %v1289
        %v1292 = vmul.f32 %v1225, %v1289
        %v1293 = vmul.f32 %v1230, %v1289
        %v1294 = vmul.f32 %v1233, %v1289
        %v1295 = vmul.f32 %v1238, %v1289
        %v1296 = vmul.f32 %v1241, %v1289
        %v1297 = vmul.f32 %v1246, %v1289
        %v1298 = vmul.f32 %v1249, %v1289
        %v1299 = vmul.f32 %v1254, %v1289
        %v1300 = vmul.f32 %v1257, %v1289
        %v1301 = vmul.f32 %v1262, %v1289
        %v1302 = vmul.f32 %v1265, %v1289
        %v1303 = vmul.f32 %v1270, %v1289
        %v1304 = vmul.f32 %v1273, %v1289
        %v1305 = vmul.f32 %v1278, %v1289
        %v1306 = vmul.f32 %v1281, %v1289
        %v1307 = vld [vmem:[%s6] sm:$0x1]
        %v1309 = vlaneseq
        %v1310 = vshrl.u32 %v1309, 7
        %v1311 = vsub.s32 0, %v1310
        %v1312 = vrot.slane %v1307, %v1311
        %v1314 = vadd.f32 %v1291, %v1312
        %v1315 = vadd.f32 %v1292, %v1312
        %v1316 = vadd.f32 %v1293, %v1312
        %v1317 = vadd.f32 %v1294, %v1312
        %v1318 = vadd.f32 %v1295, %v1312
        %v1319 = vadd.f32 %v1296, %v1312
        %v1320 = vadd.f32 %v1297, %v1312
        %v1321 = vadd.f32 %v1298, %v1312
        %v1322 = vadd.f32 %v1299, %v1312
        %v1323 = vadd.f32 %v1300, %v1312
        %v1324 = vadd.f32 %v1301, %v1312
        %v1325 = vadd.f32 %v1302, %v1312
        %v1326 = vadd.f32 %v1303, %v1312
        %v1327 = vadd.f32 %v1304, %v1312
        %v1328 = vadd.f32 %v1305, %v1312
        %v1329 = vadd.f32 %v1306, %v1312
        %v1330 = vmax.f32 %v1314, 0.0
        %v1331 = vmax.f32 %v1315, 0.0
        %v1332 = vmax.f32 %v1316, 0.0
        %v1333 = vmax.f32 %v1317, 0.0
        %v1334 = vmax.f32 %v1318, 0.0
        %v1335 = vmax.f32 %v1319, 0.0
        %v1336 = vmax.f32 %v1320, 0.0
        %v1337 = vmax.f32 %v1321, 0.0
        %v1338 = vmax.f32 %v1322, 0.0
        %v1339 = vmax.f32 %v1323, 0.0
        %v1340 = vmax.f32 %v1324, 0.0
        %v1341 = vmax.f32 %v1325, 0.0
        %v1342 = vmax.f32 %v1326, 0.0
        %v1343 = vmax.f32 %v1327, 0.0
        %v1344 = vmax.f32 %v1328, 0.0
        %v1345 = vmax.f32 %v1329, 0.0
        %1346 = vst [vmem:[%s285] sm:$0xff] %v1330
        %1347 = vst [vmem:[%s285 + $0x8] sm:$0xff] %v1331
        %1348 = vst [vmem:[%s285 + $0x10] sm:$0xff] %v1332
        %1349 = vst [vmem:[%s285 + $0x18] sm:$0xff] %v1333
        %1350 = vst [vmem:[%s285 + $0x20] sm:$0xff] %v1334
        %1351 = vst [vmem:[%s285 + $0x28] sm:$0xff] %v1335
        %1352 = vst [vmem:[%s285 + $0x30] sm:$0xff] %v1336
        %1353 = vst [vmem:[%s285 + $0x38] sm:$0xff] %v1337
        %1354 = vst [vmem:[%s285 + $0x40] sm:$0xff] %v1338
        %1355 = vst [vmem:[%s285 + $0x48] sm:$0xff] %v1339
        %1356 = vst [vmem:[%s285 + $0x50] sm:$0xff] %v1340
        %1357 = vst [vmem:[%s285 + $0x58] sm:$0xff] %v1341
        %1358 = vst [vmem:[%s285 + $0x60] sm:$0xff] %v1342
        %1359 = vst [vmem:[%s285 + $0x68] sm:$0xff] %v1343
        %1360 = vst [vmem:[%s285 + $0x70] sm:$0xff] %v1344
        %1361 = vst [vmem:[%s285 + $0x78] sm:$0xff] %v1345
        %s1362 = sand.u32 %s195, 1
        %s1363 = scalar_lea.sflag [#allocation4], %s1362
        %s1364 = sand.u32 %s195, 1
        %s1365 = smul.addr %s1364, 128
        %s1366 = scalar_lea.vmem [#allocation3], %s1365
        // Predicated region
        $region49: #{tpu_custom_call.1} parent=47 // pred_check
          %p1367 = pneg %p205
        $region50: #{tpu_custom_call.1} parent=47 // pred_check_branch
          %1369 = sbr.rel (%p1367) target = $region52
        $region51: #{tpu_custom_call.1} parent=47 // pred_region
          %s1370 = smul.u32 8, %s26
          %s1372 = ssub.s32 2048, 2048
          %1373 = vsyncadd %s1363, %s1372
          %s1374 = smul.addr %s1370, 2
          %s1375 = smul.addr %s25, 32
          %s1376 = sadd.s32 %s1374, %s1375
          %s1377 = smul.addr %s1376, 128
          %s1378 = scalar_lea.hbm %s7, %s1377
          %s1379 = sshll.u32 %s1366, 4
          %s1380 = int_to_ptr.vmem [resolvable:$true] %s1379
          %1385 = dma.vmem_to_hbm [thread:$0]  %s1380, 2048, %s1378, %s1363, 128, 128, 8
        $region52: #{tpu_custom_call.1} parent=47 // pred_fallthru
          _
      $region48: #{tpu_custom_call.1} parent=5 // pred_fallthru
        _
      %p1386 = scmp.le.s32.totalorder 2, %s16
      // Predicated region
      $region53: #{tpu_custom_call.1} parent=5 // pred_check
        %p1387 = pneg %p1386
      $region54: #{tpu_custom_call.1} parent=5 // pred_check_branch
        %1389 = sbr.rel (%p1387) target = $region56
      $region55: #{tpu_custom_call.1} parent=5 // pred_region
        %s1390 = ssub.s32 %s16, 2
        // Predicated region
        $region57: #{tpu_custom_call.1} parent=55 // pred_check
          %p1391 = pneg %p211
        $region58: #{tpu_custom_call.1} parent=55 // pred_check_branch
          %1393 = sbr.rel (%p1391) target = $region60
        $region59: #{tpu_custom_call.1} parent=55 // pred_region
          %s1394 = sand.u32 %s196, 1
          %s1395 = scalar_lea.sflag [#allocation4], %s1394
          %s1396 = sand.u32 %s196, 1
          %s1397 = smul.addr %s1396, 128
          %s1398 = scalar_lea.vmem [#allocation3], %s1397
          %1399 = dma.done %s1395, 2048
        $region60: #{tpu_custom_call.1} parent=55 // pred_fallthru
          _
      $region56: #{tpu_custom_call.1} parent=5 // pred_fallthru
        _
    $region6: #{tpu_custom_call.1} parent=1 // loop_footer
      %s20 = sadd.s32 1, %s16
    $region7: #{tpu_custom_call.1} parent=1 // loop_footer_branch
      %15 = sbr.rel target = $region3
    $region8: #{tpu_custom_call.1} parent=1 // loop_exit
      _
    %1400 = vsyncpa [#allocation4], 1
    %s1401 = scalar_lea.sflag [#allocation4], 1
    %1402 = vsyncpa %s1401, 1

</llo_original>
